<compile_context>
chip_gen: v6e
topology: v6e:2x2x1
jax: 0.10.0
libtpu: 0.0.40
codegen_flags: <defaults>
</compile_context>

<pallas_src>
import functools

import jax
import jax.numpy as jnp
from jax import lax
from jax.experimental import pallas as pl
from jax.experimental.pallas import tpu as pltpu


def _fps_knn_kernel(pts_ref, out_ref, sel_ref, d2_ref, *, group_num, k_neighbors):
    """One batch tile of FPS + kNN grouping.

    pts_ref: (Bt, 3+C, N) f32  channel-major fused [xyz ; features]
    out_ref: (Bt, 3+C, (K+1)*G) f32
             columns [0, G)            -> FPS centers (lc)
             column  G + j*G + g       -> j-th nearest neighbor of center g
    sel_ref: (Bt, (K+1)*G, N) f32 scratch  -- one-hot selection rows
    d2_ref:  (Bt, G, N) f32 scratch        -- center-to-point squared distances
    """
    G, K = group_num, k_neighbors
    pts = pts_ref[...]                                   # (Bt, 3+C, N)
    Bt, _, N = pts.shape

    # lane-dense xyz channels, hoisted out of the FPS loop
    x0 = pts[:, 0, :]                                    # (Bt, N)
    x1 = pts[:, 1, :]
    x2 = pts[:, 2, :]

    iota_n = lax.broadcasted_iota(jnp.int32, (Bt, N), 1)

    # ---------------- farthest point sampling (seed index 0) ----------------
    # TODO(synk): pointnet2 CUDA FPS variants that skip points with
    # ||p||^2 <= 1e-3 are not reproduced; this is the standard reference FPS.
    def fps_body(g, carry):
        run_dist, farthest = carry                       # (Bt, N) f32, (Bt, 1) i32
        oh = (iota_n == farthest).astype(jnp.float32)    # (Bt, N) one-hot
        sel_ref[:, pl.ds(g, 1), :] = oh[:, None, :]      # record for the lc gather
        # centroid coordinates (exact: single nonzero per row)
        c0 = jnp.sum(x0 * oh, axis=1, keepdims=True)     # (Bt, 1)
        c1 = jnp.sum(x1 * oh, axis=1, keepdims=True)
        c2 = jnp.sum(x2 * oh, axis=1, keepdims=True)
        # squared distance of every point to this centroid (pure VPU, no reduce)
        d = (x0 - c0) ** 2 + (x1 - c1) ** 2 + (x2 - c2) ** 2   # (Bt, N)
        # row g of the (G, N) center->point distance matrix, reused by kNN
        d2_ref[:, pl.ds(g, 1), :] = d[:, None, :]
        run_dist = jnp.minimum(run_dist, d)
        farthest = jnp.argmax(run_dist, axis=1, keepdims=True).astype(jnp.int32)
        return run_dist, farthest

    lax.fori_loop(
        0, G, fps_body,
        (jnp.full((Bt, N), 1e10, dtype=jnp.float32),
         jnp.zeros((Bt, 1), dtype=jnp.int32)))

    # ---------------- kNN: iterative top-K smallest distances ---------------
    iota_gn = lax.broadcasted_iota(jnp.int32, (Bt, G, N), 2)
    big = jnp.float32(1e30)

    def knn_body(j, _):
        d2 = d2_ref[...]                                               # (Bt, G, N)
        idx_j = jnp.argmin(d2, axis=2, keepdims=True).astype(jnp.int32)  # (Bt, G, 1)
        sel_j = iota_gn == idx_j                                       # (Bt, G, N)
        sel_ref[:, pl.ds((j + 1) * G, G), :] = sel_j.astype(jnp.float32)
        d2_ref[...] = jnp.where(sel_j, big, d2)                        # mask by index
        return 0

    lax.fori_loop(0, K, knn_body, 0)

    # ---------------- single fused one-hot gather matmul ---------------------
    # (Bt, 3+C, N) . (Bt, (K+1)*G, N)^T -> (Bt, 3+C, (K+1)*G); one dense store.
    sel = sel_ref[...]
    out_ref[...] = lax.dot_general(
        pts, sel,
        dimension_numbers=(((2,), (2,)), ((0,), (0,))),
        precision=lax.Precision.HIGHEST,
        preferred_element_type=jnp.float32)


def fps_knn(xyz, x, group_num, k_neighbors, *, batch_tile=8):
    """JAX/Pallas equivalent of FPS_kNN.forward.

    xyz: (B, N, 3), x: (B, N, C)
    returns (lc_xyz (B,G,3), lc_x (B,G,C), knn_xyz (B,G,K,3), knn_x (B,G,K,C))
    """
    B, N, _ = xyz.shape
    C = x.shape[-1]
    G, K = group_num, k_neighbors
    D = 3 + C
    M = (K + 1) * G

    # channel-major fused point tensor: (B, 3+C, N)  (pure XLA layout glue)
    pts = jnp.concatenate(
        [xyz.astype(jnp.float32), x.astype(jnp.float32)], axis=-1)
    pts = jnp.transpose(pts, (0, 2, 1))

    # batch tiling: run Bt point clouds per grid step to amortize the serial
    # FPS chain and the per-step pipeline overhead.
    Bt = min(batch_tile, B)
    B_pad = ((B + Bt - 1) // Bt) * Bt
    if B_pad != B:
        pts = jnp.pad(pts, ((0, B_pad - B), (0, 0), (0, 0)))

    kernel = functools.partial(_fps_knn_kernel, group_num=G, k_neighbors=K)

    fused = pl.pallas_call(
        kernel,
        out_shape=jax.ShapeDtypeStruct((B_pad, D, M), jnp.float32),
        grid=(B_pad // Bt,),
        in_specs=[pl.BlockSpec((Bt, D, N), lambda b: (b, 0, 0))],
        out_specs=pl.BlockSpec((Bt, D, M), lambda b: (b, 0, 0)),
        scratch_shapes=[
            pltpu.VMEM((Bt, M, N), jnp.float32),   # one-hot selection rows
            pltpu.VMEM((Bt, G, N), jnp.float32),   # center->point squared dists
        ],
        compiler_params=pltpu.CompilerParams(
            dimension_semantics=("parallel",)),
    )(pts)

    # layout glue (pure XLA): (B, 3+C, (K+1)*G) -> module convention
    fused = jnp.transpose(fused[:B], (0, 2, 1))        # (B, (K+1)*G, 3+C)
    lc = fused[:, :G, :]                               # (B, G, 3+C)
    knn = fused[:, G:, :].reshape(B, K, G, D)          # (B, K, G, 3+C)
    knn = jnp.transpose(knn, (0, 2, 1, 3))             # (B, G, K, 3+C)
    lc_xyz, lc_x = lc[..., :3], lc[..., 3:]
    knn_xyz, knn_x = knn[..., :3], knn[..., 3:]
    return lc_xyz, lc_x, knn_xyz, knn_x


def _fps_knn_ref(xyz, x, G, K):
    """Pure-JAX reference of the same FPS + kNN algorithm (for validation)."""
    B, N, _ = xyz.shape
    run = jnp.full((B, N), 1e10, dtype=jnp.float32)
    far = jnp.zeros((B,), dtype=jnp.int32)
    fps_idx = []
    for _ in range(G):
        fps_idx.append(far)
        c = xyz[jnp.arange(B), far]                          # (B, 3)
        d = jnp.sum((xyz - c[:, None, :]) ** 2, axis=-1)     # (B, N)
        run = jnp.minimum(run, d)
        far = jnp.argmax(run, axis=-1).astype(jnp.int32)
    fps_idx = jnp.stack(fps_idx, axis=1)                     # (B, G)
    bi = jnp.arange(B)[:, None]
    lc_xyz, lc_x = xyz[bi, fps_idx], x[bi, fps_idx]
    d2 = jnp.sum((lc_xyz[:, :, None, :] - xyz[:, None, :, :]) ** 2, axis=-1)
    lane = jnp.arange(N)[None, None, :]
    ids = []
    for _ in range(K):
        i = jnp.argmin(d2, axis=-1)                          # (B, G)
        ids.append(i)
        d2 = jnp.where(lane == i[..., None], 1e30, d2)
    knn_idx = jnp.stack(ids, axis=-1)                        # (B, G, K)
    bi2 = jnp.arange(B)[:, None, None]
    return lc_xyz, lc_x, xyz[bi2, knn_idx], x[bi2, knn_idx]


if __name__ == "__main__":
    key = jax.random.PRNGKey(0)
    B, N, C = 2, 64, 16        # batch, points, feature channels
    G, K = 16, 8               # group_num, k_neighbors

    k1, k2 = jax.random.split(key)
    xyz = jax.random.normal(k1, (B, N, 3), dtype=jnp.float32)
    feat = jax.random.normal(k2, (B, N, C), dtype=jnp.float32)

    lc_xyz, lc_x, knn_xyz, knn_x = fps_knn(xyz, feat, G, K)
    jax.block_until_ready((lc_xyz, lc_x, knn_xyz, knn_x))

    assert lc_xyz.shape == (B, G, 3)
    assert lc_x.shape == (B, G, C)
    assert knn_xyz.shape == (B, G, K, 3)
    assert knn_x.shape == (B, G, K, C)

    # the nearest neighbor of each sampled center must be the center itself
    assert jnp.allclose(knn_xyz[:, :, 0, :], lc_xyz, atol=1e-4)

    # cross-check against a pure-JAX reference of the same algorithm
    r_lc_xyz, r_lc_x, r_knn_xyz, r_knn_x = _fps_knn_ref(xyz, feat, G, K)
    assert jnp.allclose(lc_xyz, r_lc_xyz, atol=1e-4, rtol=1e-4)
    assert jnp.allclose(lc_x, r_lc_x, atol=1e-4, rtol=1e-4)
    assert jnp.allclose(knn_xyz, r_knn_xyz, atol=1e-4, rtol=1e-4)
    assert jnp.allclose(knn_x, r_knn_x, atol=1e-4, rtol=1e-4)

    print("KERNEL_OK")
</pallas_src>

<mosaic_0001>
module attributes {stable_mosaic.version = 11 : i64} {
  func.func @_fps_knn_kernel(%arg0: i32, %arg1: memref<2x19x64xf32, #tpu.memory_space<vmem>>, %arg2: memref<2x19x144xf32, #tpu.memory_space<vmem>>, %arg3: memref<2x144x64xf32, #tpu.memory_space<vmem>>, %arg4: memref<2x16x64xf32, #tpu.memory_space<vmem>>) attributes {dimension_semantics = [#tpu.dimension_semantics<parallel>], iteration_bounds = array<i64: 1>, scalar_prefetch = 0 : i64, scratch_operands = 2 : i64, tpu.core_type = #tpu.core_type<tc>, window_params = [{transform_indices = @transform_0, window_bounds = array<i64: 2, 19, 64>}, {transform_indices = @transform_1, window_bounds = array<i64: 2, 19, 144>}]} {
    %c0 = arith.constant 0 : index
    %c0_0 = arith.constant 0 : index
    %c0_1 = arith.constant 0 : index
    %0 = vector.load %arg1[%c0, %c0_0, %c0_1] : memref<2x19x64xf32, #tpu.memory_space<vmem>>, vector<2x19x64xf32>
    %1 = vector.extract_strided_slice %0 {offsets = [0, 0, 0], sizes = [2, 1, 64], strides = [1, 1, 1]} : vector<2x19x64xf32> to vector<2x1x64xf32>
    %2 = vector.shape_cast %1 : vector<2x1x64xf32> to vector<2x64xf32>
    %3 = vector.extract_strided_slice %0 {offsets = [0, 1, 0], sizes = [2, 1, 64], strides = [1, 1, 1]} : vector<2x19x64xf32> to vector<2x1x64xf32>
    %4 = vector.shape_cast %3 : vector<2x1x64xf32> to vector<2x64xf32>
    %5 = vector.extract_strided_slice %0 {offsets = [0, 2, 0], sizes = [2, 1, 64], strides = [1, 1, 1]} : vector<2x19x64xf32> to vector<2x1x64xf32>
    %6 = vector.shape_cast %5 : vector<2x1x64xf32> to vector<2x64xf32>
    %7 = tpu.iota {dimensions = array<i32: 1>} : vector<2x64xi32>
    %cst = arith.constant 1.000000e+10 : f32
    %8 = vector.broadcast %cst : f32 to vector<2x64xf32>
    %c0_i32 = arith.constant 0 : i32
    %9 = vector.broadcast %c0_i32 : i32 to vector<2x1xi32>
    %c0_i32_2 = arith.constant 0 : i32
    %c16_i32 = arith.constant 16 : i32
    %10 = arith.addi %c0_i32_2, %c16_i32 : i32
    %c1_i32 = arith.constant 1 : i32
    %11:2 = scf.for %arg5 = %c0_i32_2 to %10 step %c1_i32 iter_args(%arg6 = %8, %arg7 = %9) -> (vector<2x64xf32>, vector<2x1xi32>)  : i32 {
      %17 = vector.broadcast %arg7 : vector<2x1xi32> to vector<2x64xi32>
      %18 = arith.cmpi eq, %7, %17 : vector<2x64xi32>
      %19 = arith.extui %18 : vector<2x64xi1> to vector<2x64xi32>
      %20 = arith.sitofp %19 : vector<2x64xi32> to vector<2x64xf32>
      %21 = vector.shape_cast %20 : vector<2x64xf32> to vector<2x1x64xf32>
      %c0_15 = arith.constant 0 : index
      %22 = arith.index_cast %arg5 : i32 to index
      %c0_16 = arith.constant 0 : index
      %23 = vector.load %arg3[%c0_15, %22, %c0_16] : memref<2x144x64xf32, #tpu.memory_space<vmem>>, vector<2x1x64xf32>
      tpu.vector_store %arg3[%c0_15, %22, %c0_16], %21 {strides = array<i32>} : memref<2x144x64xf32, #tpu.memory_space<vmem>>, vector<2x1x64xf32>,
      %24 = arith.mulf %2, %20 : vector<2x64xf32>
      %cst_17 = arith.constant dense<0.000000e+00> : vector<2xf32>
      %25 = vector.multi_reduction <add>, %24, %cst_17 [1] : vector<2x64xf32> to vector<2xf32>
      %26 = vector.shape_cast %25 : vector<2xf32> to vector<2x1xf32>
      %27 = arith.mulf %4, %20 : vector<2x64xf32>
      %cst_18 = arith.constant dense<0.000000e+00> : vector<2xf32>
      %28 = vector.multi_reduction <add>, %27, %cst_18 [1] : vector<2x64xf32> to vector<2xf32>
      %29 = vector.shape_cast %28 : vector<2xf32> to vector<2x1xf32>
      %30 = arith.mulf %6, %20 : vector<2x64xf32>
      %cst_19 = arith.constant dense<0.000000e+00> : vector<2xf32>
      %31 = vector.multi_reduction <add>, %30, %cst_19 [1] : vector<2x64xf32> to vector<2xf32>
      %32 = vector.shape_cast %31 : vector<2xf32> to vector<2x1xf32>
      %33 = vector.broadcast %26 : vector<2x1xf32> to vector<2x64xf32>
      %34 = arith.subf %2, %33 : vector<2x64xf32>
      %35 = arith.mulf %34, %34 : vector<2x64xf32>
      %36 = vector.broadcast %29 : vector<2x1xf32> to vector<2x64xf32>
      %37 = arith.subf %4, %36 : vector<2x64xf32>
      %38 = arith.mulf %37, %37 : vector<2x64xf32>
      %39 = arith.addf %35, %38 : vector<2x64xf32>
      %40 = vector.broadcast %32 : vector<2x1xf32> to vector<2x64xf32>
      %41 = arith.subf %6, %40 : vector<2x64xf32>
      %42 = arith.mulf %41, %41 : vector<2x64xf32>
      %43 = arith.addf %39, %42 : vector<2x64xf32>
      %44 = vector.shape_cast %43 : vector<2x64xf32> to vector<2x1x64xf32>
      %c0_20 = arith.constant 0 : index
      %45 = arith.index_cast %arg5 : i32 to index
      %c0_21 = arith.constant 0 : index
      %46 = vector.load %arg4[%c0_20, %45, %c0_21] : memref<2x16x64xf32, #tpu.memory_space<vmem>>, vector<2x1x64xf32>
      tpu.vector_store %arg4[%c0_20, %45, %c0_21], %44 {strides = array<i32>} : memref<2x16x64xf32, #tpu.memory_space<vmem>>, vector<2x1x64xf32>,
      %47 = arith.minimumf %arg6, %43 : vector<2x64xf32>
      %48 = tpu.reduce_index %47 {axis = 1 : i32, kind = #tpu.reduction_kind<arg_max>} : vector<2x64xf32> -> vector<2xi32>
      %49 = vector.shape_cast %48 : vector<2xi32> to vector<2x1xi32>
      scf.yield %47, %49 : vector<2x64xf32>, vector<2x1xi32>
    }
    %c16_i32_3 = arith.constant 16 : i32
    %12 = tpu.iota {dimensions = array<i32: 2>} : vector<2x16x64xi32>
    %cst_4 = arith.constant 1.000000e+30 : f32
    %c0_i32_5 = arith.constant 0 : i32
    %c8_i32 = arith.constant 8 : i32
    %13 = arith.addi %c0_i32_5, %c8_i32 : i32
    %c1_i32_6 = arith.constant 1 : i32
    scf.for %arg5 = %c0_i32_5 to %13 step %c1_i32_6  : i32 {
      %c0_15 = arith.constant 0 : index
      %c0_16 = arith.constant 0 : index
      %c0_17 = arith.constant 0 : index
      %17 = vector.load %arg4[%c0_15, %c0_16, %c0_17] : memref<2x16x64xf32, #tpu.memory_space<vmem>>, vector<2x16x64xf32>
      %18 = tpu.reduce_index %17 {axis = 2 : i32, kind = #tpu.reduction_kind<arg_min>} : vector<2x16x64xf32> -> vector<2x16xi32>
      %19 = vector.shape_cast %18 : vector<2x16xi32> to vector<2x16x1xi32>
      %20 = vector.broadcast %19 : vector<2x16x1xi32> to vector<2x16x64xi32>
      %21 = arith.cmpi eq, %12, %20 : vector<2x16x64xi32>
      %22 = arith.extui %21 : vector<2x16x64xi1> to vector<2x16x64xi32>
      %23 = arith.sitofp %22 : vector<2x16x64xi32> to vector<2x16x64xf32>
      %c1_i32_18 = arith.constant 1 : i32
      %24 = arith.addi %arg5, %c1_i32_18 : i32
      %c16_i32_19 = arith.constant 16 : i32
      %25 = arith.muli %24, %c16_i32_19 : i32
      %c0_20 = arith.constant 0 : index
      %26 = arith.index_cast %25 : i32 to index
      %c0_21 = arith.constant 0 : index
      %27 = vector.load %arg3[%c0_20, %26, %c0_21] : memref<2x144x64xf32, #tpu.memory_space<vmem>>, vector<2x16x64xf32>
      tpu.vector_store %arg3[%c0_20, %26, %c0_21], %23 {strides = array<i32>} : memref<2x144x64xf32, #tpu.memory_space<vmem>>, vector<2x16x64xf32>,
      %28 = vector.broadcast %cst_4 : f32 to vector<2x16x64xf32>
      %29 = arith.select %21, %28, %17 : vector<2x16x64xi1>, vector<2x16x64xf32>
      %c0_22 = arith.constant 0 : index
      %c0_23 = arith.constant 0 : index
      %c0_24 = arith.constant 0 : index
      %30 = vector.load %arg4[%c0_22, %c0_23, %c0_24] : memref<2x16x64xf32, #tpu.memory_space<vmem>>, vector<2x16x64xf32>
      tpu.vector_store %arg4[%c0_22, %c0_23, %c0_24], %29 {strides = array<i32>} : memref<2x16x64xf32, #tpu.memory_space<vmem>>, vector<2x16x64xf32>,
    }
    %c8_i32_7 = arith.constant 8 : i32
    %c0_8 = arith.constant 0 : index
    %c0_9 = arith.constant 0 : index
    %c0_10 = arith.constant 0 : index
    %14 = vector.load %arg3[%c0_8, %c0_9, %c0_10] : memref<2x144x64xf32, #tpu.memory_space<vmem>>, vector<2x144x64xf32>
    %cst_11 = arith.constant dense<0.000000e+00> : vector<2x19x144xf32>
    %15 = tpu.matmul %0, %14, %cst_11 {dimension_numbers = #tpu.dot_dimension_numbers<[2], [2], [1], [1], [0, 0, 0, 1, 1, 1], [0], [0]>, precision = #tpu.contract_precision<fp32>} : vector<2x19x64xf32>, vector<2x144x64xf32>, vector<2x19x144xf32> -> vector<2x19x144xf32>
    %c0_12 = arith.constant 0 : index
    %c0_13 = arith.constant 0 : index
    %c0_14 = arith.constant 0 : index
    %16 = vector.load %arg2[%c0_12, %c0_13, %c0_14] : memref<2x19x144xf32, #tpu.memory_space<vmem>>, vector<2x19x144xf32>
    tpu.vector_store %arg2[%c0_12, %c0_13, %c0_14], %15 {strides = array<i32>} : memref<2x19x144xf32, #tpu.memory_space<vmem>>, vector<2x19x144xf32>,
    return
  }
  func.func @transform_0(%arg0: i32) -> (i32, i32, i32) {
    %c0_i32 = arith.constant 0 : i32
    %c0_i32_0 = arith.constant 0 : i32
    %c0_i32_1 = arith.constant 0 : i32
    return %arg0, %c0_i32, %c0_i32_0 : i32, i32, i32
  }
  func.func @transform_1(%arg0: i32) -> (i32, i32, i32) {
    %c0_i32 = arith.constant 0 : i32
    %c0_i32_0 = arith.constant 0 : i32
    %c0_i32_1 = arith.constant 0 : i32
    return %arg0, %c0_i32, %c0_i32_0 : i32, i32, i32
  }
}

</mosaic_0001>

<llo_original>
// kernel: tpu_custom_call.1
$region0: #{tpu_custom_call.1}
  #allocation0 [shape = 'u32[]', space=smem, size = 0x4, offset = 0x4, fixed_abs, tag = 'smem constant byte address 0x4 - core index']
  #allocation1 [shape = 'u32[144,128]{1,0:T(1,128)}', space=vmem, size = 0x12000, scoped, tag = 'internal scratch']
  #allocation2 [shape = 'f32[2,144,64]{2,1,0:T(8,128)}', space=vmem, size = 0x24000, scoped, tag = 'scratch operand']
  #allocation3 [shape = 'f32[2,16,64]{2,1,0:T(8,128)}', space=vmem, size = 0x4000, scoped, tag = 'scratch operand']
  %s0 = inlined_call_operand.vmem [shape: f32[2,19,64], index: 0, kind: input, shape index: {}]
  %s1 = inlined_call_operand.vmem [shape: f32[2,19,144], index: 1, kind: output, shape index: {}]
  %s2 = sld [smem:[#allocation0]]
  $region28: #{tpu_custom_call.1} parent=0
    _
  %s4 = ssub.s32 1, %s2
  %s5 = scalar_select 0, %s4, %s2
  // Predicated region
  $region2: #{tpu_custom_call.1} parent=0 // pred_check
    _
  $region3: #{tpu_custom_call.1} parent=0 // pred_check_branch
    %7 = sbr.rel (0) target = $region5
  $region4: #{tpu_custom_call.1} parent=0 // pred_region
    _
  $region5: #{tpu_custom_call.1} parent=0 // pred_fallthru
    _
  %v8 = vld [vmem:[%s0] sm:$0xff]
  %v9 = vld [vmem:[%s0 + $0x8] sm:$0xff]
  %v10 = vld [vmem:[%s0 + $0x10] sm:$0x7]
  %v11 = vld [vmem:[%s0 + $0x18] sm:$0xff]
  %v12 = vld [vmem:[%s0 + $0x20] sm:$0xff]
  %v13 = vld [vmem:[%s0 + $0x28] sm:$0x7]
  %v14 = vlaneseq
  %v15 = vand.u32 %v14, 127
  loop: start=0, step=1, limit=16
  $region6: #{tpu_custom_call.1} parent=0 // loop_pre_header
    _
  $region7: #{tpu_custom_call.1} parent=0 // loop_header
    %s17 = sphi 0, %s21
    %p18 = scmp.ge.s32.totalorder %s17, 16
    %v22 = vphi 1e+10, %v143
    %v23 = vphi 1e+10, %v144
    %v24 = vphi 0, %v152
  $region8: #{tpu_custom_call.1} parent=0 // loop_header_branch
    %20 = sbr.rel (%p18) target = $region12
  $region9: #{tpu_custom_call.1} parent=0 // loop_body
    %vm25 = vcmp.eq.s32.totalorder %v15, %v24
    %v26 = vsel %vm25, 1, 0
    %v27 = vcvt.s32.f32 %v26
    %v30 = vunpack.c.l.s4 1966171168
    %v31 = vunpack.c.0.s8 %v30
    %v32 = vlaneseq
    %v33 = vshrl.u32 %v32, 7
    %v34 = vsub.s32 %v31, %v33
    %v35 = vrot.slane %v27, %v34
    %v36 = vcombine.high %v35, %v35
    %v38 = vunpack.c.l.s4 1966171168
    %v39 = vunpack.c.0.s8 %v38
    %v40 = vlaneseq
    %v41 = vshrl.u32 %v40, 7
    %v42 = vsub.s32 %v39, %v41
    %v43 = vrot.slane %v35, %v42
    %v45 = vunpack.c.l.s4 1966171168
    %v46 = vunpack.c.0.s8 %v45
    %v47 = vlaneseq
    %v48 = vshrl.u32 %v47, 7
    %v49 = vsub.s32 %v46, %v48
    %v50 = vrot.slane %v36, %v49
    %s53 = scalar_lea.vmem [#allocation2], %s17
    %vm54 = vcmask 516096
    %55 = vst.msk [vmem:[%s53] sm:$0x1] %vm54, %v43
    %56 = vst.msk [vmem:[%s53 + $0x90] sm:$0x1] %vm54, %v50
    %v57 = vrot.slane %v27, 1
    %v60 = vmul.f32 %v8, %v27
    %v61 = vmul.f32 %v11, %v57
    %v64 = vrot.slane %v61, 7
    %vm65 = vcmask 1041409
    %v66 = vsel %vm65, %v64, %v60
    %vm68 = vcmask 517120
    %v69 = vsel %vm68, %v66, 0.0
    %70 = vadd.xlane.f32.xlu0 %v69
    %v71 = vpop.xlane.xlu0 %70
    %v72 = vrot.slane %v27, 7
    %v74 = vmul.f32 %v8, %v72
    %v75 = vmul.f32 %v11, %v27
    %v78 = vrot.slane %v75, 7
    %vm79 = vcmask 1042434
    %v80 = vsel %vm79, %v78, %v74
    %vm82 = vcmask 518145
    %v83 = vsel %vm82, %v80, 0.0
    %84 = vadd.xlane.f32.xlu0 %v83
    %v85 = vpop.xlane.xlu0 %84
    %v86 = vrot.slane %v27, 6
    %v88 = vmul.f32 %v8, %v86
    %v89 = vmul.f32 %v11, %v72
    %v92 = vrot.slane %v89, 7
    %vm93 = vcmask 1043459
    %v94 = vsel %vm93, %v92, %v88
    %vm96 = vcmask 519170
    %v97 = vsel %vm96, %v94, 0.0
    %98 = vadd.xlane.f32.xlu0 %v97
    %v99 = vpop.xlane.xlu0 %98
    %v101 = vrot.slane %v71, 1
    %v104 = vsub.f32 %v8, %v71
    %v105 = vsub.f32 %v11, %v101
    %v106 = vmul.f32 %v104, %v104
    %v107 = vmul.f32 %v105, %v105
    %v109 = vrot.slane %v85, 1
    %v112 = vsub.f32 %v8, %v85
    %v113 = vsub.f32 %v11, %v109
    %v114 = vmul.f32 %v112, %v112
    %v115 = vmul.f32 %v113, %v113
    %v118 = vrot.slane %v114, 1
    %v119 = vrot.slane %v115, 1
    %v122 = vadd.f32 %v106, %v118
    %v123 = vadd.f32 %v107, %v119
    %v125 = vrot.slane %v99, 1
    %v128 = vsub.f32 %v8, %v99
    %v129 = vsub.f32 %v11, %v125
    %v130 = vmul.f32 %v128, %v128
    %v131 = vmul.f32 %v129, %v129
    %v134 = vrot.slane %v130, 2
    %v135 = vrot.slane %v131, 2
    %v138 = vadd.f32 %v122, %v134
    %v139 = vadd.f32 %v123, %v135
    %s140 = scalar_lea.vmem [#allocation3], %s17
    %141 = vst.msk [vmem:[%s140] sm:$0x1] %vm54, %v138
    %142 = vst.msk [vmem:[%s140 + $0x10] sm:$0x1] %vm54, %v139
    %v143 = vmin.f32 %v22, %v138
    %v144 = vmin.f32 %v23, %v139
    %v147 = vrot.slane %v144, 7
    %v148 = vsel %vm65, %v147, %v143
    %v150 = vsel %vm68, %v148, -inf
    %151 = vmax.index.xlane.f32.xlu0 %v150
    %v152 = vpop.xlane.xlu0 %151
  $region10: #{tpu_custom_call.1} parent=0 // loop_footer
    %s21 = sadd.s32 1, %s17
  $region11: #{tpu_custom_call.1} parent=0 // loop_footer_branch
    %16 = sbr.rel target = $region7
  $region12: #{tpu_custom_call.1} parent=0 // loop_exit
    _
  loop: start=0, step=1, limit=8
  $region13: #{tpu_custom_call.1} parent=0 // loop_pre_header
    _
  $region14: #{tpu_custom_call.1} parent=0 // loop_header
    %s154 = sphi 0, %s158
    %p155 = scmp.ge.s32.totalorder %s154, 8
  $region15: #{tpu_custom_call.1} parent=0 // loop_header_branch
    %157 = sbr.rel (%p155) target = $region19
  $region16: #{tpu_custom_call.1} parent=0 // loop_body
    %v159 = vld [vmem:[#allocation3] sm:$0xff]
    %v160 = vld [vmem:[#allocation3 + $0x8] sm:$0xff]
    %v161 = vld [vmem:[#allocation3 + $0x10] sm:$0xff]
    %v162 = vld [vmem:[#allocation3 + $0x18] sm:$0xff]
    %vm163 = vcmask 523264
    %v164 = vsel %vm163, %v159, inf
    %165 = vmin.index.xlane.f32.xlu0 %v164
    %v166 = vpop.xlane.xlu0 %165
    %v167 = vsel %vm163, %v160, inf
    %168 = vmin.index.xlane.f32.xlu0 %v167
    %v169 = vpop.xlane.xlu0 %168
    %v170 = vsel %vm163, %v161, inf
    %171 = vmin.index.xlane.f32.xlu0 %v170
    %v172 = vpop.xlane.xlu0 %171
    %v173 = vsel %vm163, %v162, inf
    %174 = vmin.index.xlane.f32.xlu0 %v173
    %v175 = vpop.xlane.xlu0 %174
    %vm176 = vcmp.eq.s32.totalorder %v15, %v166
    %vm177 = vcmp.eq.s32.totalorder %v15, %v169
    %vm178 = vcmp.eq.s32.totalorder %v15, %v172
    %vm179 = vcmp.eq.s32.totalorder %v15, %v175
    %v180 = vsel %vm176, 1, 0
    %v181 = vsel %vm177, 1, 0
    %v182 = vsel %vm178, 1, 0
    %v183 = vsel %vm179, 1, 0
    %v184 = vcvt.s32.f32 %v180
    %v185 = vcvt.s32.f32 %v181
    %v186 = vcvt.s32.f32 %v182
    %v187 = vcvt.s32.f32 %v183
    %s188 = sadd.s32 %s154, 1
    %s189 = smul.u32 %s188, 16
    %s190 = scalar_lea.vmem [#allocation2], %s189
    %191 = vst.msk [vmem:[%s190] sm:$0xff] %vm163, %v184
    %192 = vst.msk [vmem:[%s190 + $0x8] sm:$0xff] %vm163, %v185
    %193 = vst.msk [vmem:[%s190 + $0x90] sm:$0xff] %vm163, %v186
    %194 = vst.msk [vmem:[%s190 + $0x98] sm:$0xff] %vm163, %v187
    %v195 = vsel %vm176, 1e+30, %v159
    %v196 = vsel %vm177, 1e+30, %v160
    %v197 = vsel %vm178, 1e+30, %v161
    %v198 = vsel %vm179, 1e+30, %v162
    %199 = vst.msk [vmem:[#allocation3] sm:$0xff] %vm163, %v195
    %200 = vst.msk [vmem:[#allocation3 + $0x8] sm:$0xff] %vm163, %v196
    %201 = vst.msk [vmem:[#allocation3 + $0x10] sm:$0xff] %vm163, %v197
    %202 = vst.msk [vmem:[#allocation3 + $0x18] sm:$0xff] %vm163, %v198
  $region17: #{tpu_custom_call.1} parent=0 // loop_footer
    %s158 = sadd.s32 1, %s154
  $region18: #{tpu_custom_call.1} parent=0 // loop_footer_branch
    %153 = sbr.rel target = $region14
  $region19: #{tpu_custom_call.1} parent=0 // loop_exit
    _
  %v203 = vld [vmem:[#allocation2] sm:$0xff]
  %v204 = vld [vmem:[#allocation2 + $0x8] sm:$0xff]
  %v205 = vld [vmem:[#allocation2 + $0x10] sm:$0xff]
  %v206 = vld [vmem:[#allocation2 + $0x18] sm:$0xff]
  %v207 = vld [vmem:[#allocation2 + $0x20] sm:$0xff]
  %v208 = vld [vmem:[#allocation2 + $0x28] sm:$0xff]
  %v209 = vld [vmem:[#allocation2 + $0x30] sm:$0xff]
  %v210 = vld [vmem:[#allocation2 + $0x38] sm:$0xff]
  %v211 = vld [vmem:[#allocation2 + $0x40] sm:$0xff]
  %v212 = vld [vmem:[#allocation2 + $0x48] sm:$0xff]
  %v213 = vld [vmem:[#allocation2 + $0x50] sm:$0xff]
  %v214 = vld [vmem:[#allocation2 + $0x58] sm:$0xff]
  %v215 = vld [vmem:[#allocation2 + $0x60] sm:$0xff]
  %v216 = vld [vmem:[#allocation2 + $0x68] sm:$0xff]
  %v217 = vld [vmem:[#allocation2 + $0x70] sm:$0xff]
  %v218 = vld [vmem:[#allocation2 + $0x78] sm:$0xff]
  %v219 = vld [vmem:[#allocation2 + $0x80] sm:$0xff]
  %v220 = vld [vmem:[#allocation2 + $0x88] sm:$0xff]
  %v221 = vld [vmem:[#allocation2 + $0x90] sm:$0xff]
  %v222 = vld [vmem:[#allocation2 + $0x98] sm:$0xff]
  %v223 = vld [vmem:[#allocation2 + $0xa0] sm:$0xff]
  %v224 = vld [vmem:[#allocation2 + $0xa8] sm:$0xff]
  %v225 = vld [vmem:[#allocation2 + $0xb0] sm:$0xff]
  %v226 = vld [vmem:[#allocation2 + $0xb8] sm:$0xff]
  %v227 = vld [vmem:[#allocation2 + $0xc0] sm:$0xff]
  %v228 = vld [vmem:[#allocation2 + $0xc8] sm:$0xff]
  %v229 = vld [vmem:[#allocation2 + $0xd0] sm:$0xff]
  %v230 = vld [vmem:[#allocation2 + $0xd8] sm:$0xff]
  %v231 = vld [vmem:[#allocation2 + $0xe0] sm:$0xff]
  %v232 = vld [vmem:[#allocation2 + $0xe8] sm:$0xff]
  %v233 = vld [vmem:[#allocation2 + $0xf0] sm:$0xff]
  %v234 = vld [vmem:[#allocation2 + $0xf8] sm:$0xff]
  %v235 = vld [vmem:[#allocation2 + $0x100] sm:$0xff]
  %v236 = vld [vmem:[#allocation2 + $0x108] sm:$0xff]
  %v237 = vld [vmem:[#allocation2 + $0x110] sm:$0xff]
  %v238 = vld [vmem:[#allocation2 + $0x118] sm:$0xff]
  %vm239 = vcmask 523264
  %v241 = vsel %vm239, %v8, 0
  %v244 = vsel %vm239, %v9, 0
  %v247 = vsel %vm239, %v10, 0
  %v250 = vsel %vm239, %v203, 0
  %v253 = vsel %vm239, %v204, 0
  %v256 = vsel %vm239, %v205, 0
  %v259 = vsel %vm239, %v206, 0
  %v262 = vsel %vm239, %v207, 0
  %v265 = vsel %vm239, %v208, 0
  %v268 = vsel %vm239, %v209, 0
  %v271 = vsel %vm239, %v210, 0
  %v274 = vsel %vm239, %v211, 0
  %v277 = vsel %vm239, %v212, 0
  %v280 = vsel %vm239, %v213, 0
  %v283 = vsel %vm239, %v214, 0
  %v286 = vsel %vm239, %v215, 0
  %v289 = vsel %vm239, %v216, 0
  %v292 = vsel %vm239, %v217, 0
  %v295 = vsel %vm239, %v218, 0
  %v298 = vsel %vm239, %v219, 0
  %v301 = vsel %vm239, %v220, 0
  %303 = vmatprep.subr.mxu0 0.0
  %v304 = vand.u32 %v295, 4294901760
  %305 = vmatpush1.xpose.msra.mxu0 %v304
  %306 = vmatprep.subr.mxu0 0.0
  %v307 = vand.u32 %v292, 4294901760
  %308 = vmatpush1.xpose.msra.mxu0 %v307
  %309 = vmatprep.subr.mxu0 0.0
  %v310 = vand.u32 %v289, 4294901760
  %311 = vmatpush1.xpose.msra.mxu0 %v310
  %312 = vmatprep.subr.mxu0 0.0
  %v313 = vand.u32 %v286, 4294901760
  %314 = vmatpush1.xpose.msra.mxu0 %v313
  %315 = vmatprep.subr.mxu0 0.0
  %v316 = vand.u32 %v283, 4294901760
  %317 = vmatpush1.xpose.msra.mxu0 %v316
  %318 = vmatprep.subr.mxu0 0.0
  %v319 = vand.u32 %v280, 4294901760
  %320 = vmatpush1.xpose.msra.mxu0 %v319
  %321 = vmatprep.subr.mxu0 0.0
  %v322 = vand.u32 %v277, 4294901760
  %323 = vmatpush1.xpose.msra.mxu0 %v322
  %324 = vmatprep.subr.mxu0 0.0
  %v325 = vand.u32 %v274, 4294901760
  %326 = vmatpush1.xpose.msra.mxu0 %v325
  %327 = vmatprep.subr.mxu0 0.0
  %v328 = vand.u32 %v271, 4294901760
  %329 = vmatpush1.xpose.msra.mxu0 %v328
  %330 = vmatprep.subr.mxu0 0.0
  %v331 = vand.u32 %v268, 4294901760
  %332 = vmatpush1.xpose.msra.mxu0 %v331
  %333 = vmatprep.subr.mxu0 0.0
  %v334 = vand.u32 %v265, 4294901760
  %335 = vmatpush1.xpose.msra.mxu0 %v334
  %336 = vmatprep.subr.mxu0 0.0
  %v337 = vand.u32 %v262, 4294901760
  %338 = vmatpush1.xpose.msra.mxu0 %v337
  %339 = vmatprep.subr.mxu0 0.0
  %v340 = vand.u32 %v259, 4294901760
  %341 = vmatpush1.xpose.msra.mxu0 %v340
  %342 = vmatprep.subr.mxu0 0.0
  %v343 = vand.u32 %v256, 4294901760
  %344 = vmatpush1.xpose.msra.mxu0 %v343
  %345 = vmatprep.subr.mxu0 0.0
  %v346 = vand.u32 %v253, 4294901760
  %347 = vmatpush1.xpose.msra.mxu0 %v346
  %348 = vmatprep.subr.mxu0 0.0
  %v349 = vand.u32 %v250, 4294901760
  %350 = vmatpush1.xpose.msra.mxu0 %v349
  %351 = vmatprep.subr.mxu0 0.0
  %352 = vmatpush2.xpose.msra.mxu0 0.0
  %353 = vmatprep.subr.mxu0 0.0
  %354 = vmatpush2.xpose.msra.mxu0 0.0
  %355 = vmatprep.subr.mxu0 0.0
  %356 = vmatpush2.xpose.msra.mxu0 0.0
  %357 = vmatprep.subr.mxu0 0.0
  %358 = vmatpush2.xpose.msra.mxu0 0.0
  %359 = vmatprep.subr.mxu0 0.0
  %360 = vmatpush2.xpose.msra.mxu0 0.0
  %361 = vmatprep.subr.mxu0 0.0
  %362 = vmatpush2.xpose.msra.mxu0 0.0
  %363 = vmatprep.subr.mxu0 0.0
  %364 = vmatpush2.xpose.msra.mxu0 0.0
  %365 = vmatprep.subr.mxu0 0.0
  %366 = vmatpush2.xpose.msra.mxu0 0.0
  %367 = vmatprep.subr.mxu0 0.0
  %368 = vmatpush2.xpose.msra.mxu0 0.0
  %369 = vmatprep.subr.mxu0 0.0
  %370 = vmatpush2.xpose.msra.mxu0 0.0
  %371 = vmatprep.subr.mxu0 0.0
  %372 = vmatpush2.xpose.msra.mxu0 0.0
  %373 = vmatprep.subr.mxu0 0.0
  %374 = vmatpush2.xpose.msra.mxu0 0.0
  %375 = vmatprep.subr.mxu0 0.0
  %376 = vmatpush2.xpose.msra.mxu0 0.0
  %377 = vmatprep.subr.mxu0 0.0
  %378 = vmatpush2.xpose.msra.mxu0 0.0
  %379 = vmatprep.subr.mxu0 0.0
  %v380 = vand.u32 %v301, 4294901760
  %381 = vmatpush2.xpose.msra.mxu0 %v380
  %382 = vmatprep.subr.mxu0 0.0
  %v383 = vand.u32 %v298, 4294901760
  %384 = vmatpush2.xpose.msra.mxu0 %v383
  %385 = vmatprep.mubr.f32.mxu0 0.0
  %v386 = vand.u32 %v241, 4294901760
  %v387 = vsub.f32 %v241, %v386
  %v388 = vand.u32 %v387, 4294901760
  %v389 = vsub.f32 %v387, %v388
  %v390 = vand.u32 %v389, 4294901760
  %391 = vmatmul.mubr.f32.gmra.mxu0 %v390
  %v392 = vpop.f32.mrf.mxu0
  %v393 = vadd.f32 0.0, %v392
  %v394 = vpop.f32.mrf.mxu0
  %v395 = vadd.f32 0.0, %v394
  %396 = vmatprep.mubr.f32.mxu0 0.0
  %v397 = vand.u32 %v244, 4294901760
  %v398 = vsub.f32 %v244, %v397
  %v399 = vand.u32 %v398, 4294901760
  %v400 = vsub.f32 %v398, %v399
  %v401 = vand.u32 %v400, 4294901760
  %402 = vmatmul.mubr.f32.gmra.mxu0 %v401
  %v403 = vpop.f32.mrf.mxu0
  %v404 = vadd.f32 0.0, %v403
  %v405 = vpop.f32.mrf.mxu0
  %v406 = vadd.f32 0.0, %v405
  %407 = vmatprep.mubr.f32.mxu0 0.0
  %v408 = vand.u32 %v247, 4294901760
  %v409 = vsub.f32 %v247, %v408
  %v410 = vand.u32 %v409, 4294901760
  %v411 = vsub.f32 %v409, %v410
  %v412 = vand.u32 %v411, 4294901760
  %413 = vmatmul.mubr.f32.gmra.mxu0 %v412
  %v414 = vpop.f32.mrf.mxu0
  %v415 = vadd.f32 0.0, %v414
  %v416 = vpop.f32.mrf.mxu0
  %v417 = vadd.f32 0.0, %v416
  %418 = vdwg.mxu0
  %419 = vmatprep.subr.mxu0 0.0
  %v420 = vand.u32 %v295, 4294901760
  %v421 = vsub.f32 %v295, %v420
  %v422 = vand.u32 %v421, 4294901760
  %v423 = vsub.f32 %v421, %v422
  %v424 = vand.u32 %v423, 4294901760
  %425 = vmatpush1.xpose.msra.mxu0 %v424
  %426 = vmatprep.subr.mxu0 0.0
  %v427 = vand.u32 %v292, 4294901760
  %v428 = vsub.f32 %v292, %v427
  %v429 = vand.u32 %v428, 4294901760
  %v430 = vsub.f32 %v428, %v429
  %v431 = vand.u32 %v430, 4294901760
  %432 = vmatpush1.xpose.msra.mxu0 %v431
  %433 = vmatprep.subr.mxu0 0.0
  %v434 = vand.u32 %v289, 4294901760
  %v435 = vsub.f32 %v289, %v434
  %v436 = vand.u32 %v435, 4294901760
  %v437 = vsub.f32 %v435, %v436
  %v438 = vand.u32 %v437, 4294901760
  %439 = vmatpush1.xpose.msra.mxu0 %v438
  %440 = vmatprep.subr.mxu0 0.0
  %v441 = vand.u32 %v286, 4294901760
  %v442 = vsub.f32 %v286, %v441
  %v443 = vand.u32 %v442, 4294901760
  %v444 = vsub.f32 %v442, %v443
  %v445 = vand.u32 %v444, 4294901760
  %446 = vmatpush1.xpose.msra.mxu0 %v445
  %447 = vmatprep.subr.mxu0 0.0
  %v448 = vand.u32 %v283, 4294901760
  %v449 = vsub.f32 %v283, %v448
  %v450 = vand.u32 %v449, 4294901760
  %v451 = vsub.f32 %v449, %v450
  %v452 = vand.u32 %v451, 4294901760
  %453 = vmatpush1.xpose.msra.mxu0 %v452
  %454 = vmatprep.subr.mxu0 0.0
  %v455 = vand.u32 %v280, 4294901760
  %v456 = vsub.f32 %v280, %v455
  %v457 = vand.u32 %v456, 4294901760
  %v458 = vsub.f32 %v456, %v457
  %v459 = vand.u32 %v458, 4294901760
  %460 = vmatpush1.xpose.msra.mxu0 %v459
  %461 = vmatprep.subr.mxu0 0.0
  %v462 = vand.u32 %v277, 4294901760
  %v463 = vsub.f32 %v277, %v462
  %v464 = vand.u32 %v463, 4294901760
  %v465 = vsub.f32 %v463, %v464
  %v466 = vand.u32 %v465, 4294901760
  %467 = vmatpush1.xpose.msra.mxu0 %v466
  %468 = vmatprep.subr.mxu0 0.0
  %v469 = vand.u32 %v274, 4294901760
  %v470 = vsub.f32 %v274, %v469
  %v471 = vand.u32 %v470, 4294901760
  %v472 = vsub.f32 %v470, %v471
  %v473 = vand.u32 %v472, 4294901760
  %474 = vmatpush1.xpose.msra.mxu0 %v473
  %475 = vmatprep.subr.mxu0 0.0
  %v476 = vand.u32 %v271, 4294901760
  %v477 = vsub.f32 %v271, %v476
  %v478 = vand.u32 %v477, 4294901760
  %v479 = vsub.f32 %v477, %v478
  %v480 = vand.u32 %v479, 4294901760
  %481 = vmatpush1.xpose.msra.mxu0 %v480
  %482 = vmatprep.subr.mxu0 0.0
  %v483 = vand.u32 %v268, 4294901760
  %v484 = vsub.f32 %v268, %v483
  %v485 = vand.u32 %v484, 4294901760
  %v486 = vsub.f32 %v484, %v485
  %v487 = vand.u32 %v486, 4294901760
  %488 = vmatpush1.xpose.msra.mxu0 %v487
  %489 = vmatprep.subr.mxu0 0.0
  %v490 = vand.u32 %v265, 4294901760
  %v491 = vsub.f32 %v265, %v490
  %v492 = vand.u32 %v491, 4294901760
  %v493 = vsub.f32 %v491, %v492
  %v494 = vand.u32 %v493, 4294901760
  %495 = vmatpush1.xpose.msra.mxu0 %v494
  %496 = vmatprep.subr.mxu0 0.0
  %v497 = vand.u32 %v262, 4294901760
  %v498 = vsub.f32 %v262, %v497
  %v499 = vand.u32 %v498, 4294901760
  %v500 = vsub.f32 %v498, %v499
  %v501 = vand.u32 %v500, 4294901760
  %502 = vmatpush1.xpose.msra.mxu0 %v501
  %503 = vmatprep.subr.mxu0 0.0
  %v504 = vand.u32 %v259, 4294901760
  %v505 = vsub.f32 %v259, %v504
  %v506 = vand.u32 %v505, 4294901760
  %v507 = vsub.f32 %v505, %v506
  %v508 = vand.u32 %v507, 4294901760
  %509 = vmatpush1.xpose.msra.mxu0 %v508
  %510 = vmatprep.subr.mxu0 0.0
  %v511 = vand.u32 %v256, 4294901760
  %v512 = vsub.f32 %v256, %v511
  %v513 = vand.u32 %v512, 4294901760
  %v514 = vsub.f32 %v512, %v513
  %v515 = vand.u32 %v514, 4294901760
  %516 = vmatpush1.xpose.msra.mxu0 %v515
  %517 = vmatprep.subr.mxu0 0.0
  %v518 = vand.u32 %v253, 4294901760
  %v519 = vsub.f32 %v253, %v518
  %v520 = vand.u32 %v519, 4294901760
  %v521 = vsub.f32 %v519, %v520
  %v522 = vand.u32 %v521, 4294901760
  %523 = vmatpush1.xpose.msra.mxu0 %v522
  %524 = vmatprep.subr.mxu0 0.0
  %v525 = vand.u32 %v250, 4294901760
  %v526 = vsub.f32 %v250, %v525
  %v527 = vand.u32 %v526, 4294901760
  %v528 = vsub.f32 %v526, %v527
  %v529 = vand.u32 %v528, 4294901760
  %530 = vmatpush1.xpose.msra.mxu0 %v529
  %531 = vmatprep.subr.mxu0 0.0
  %532 = vmatpush2.xpose.msra.mxu0 0.0
  %533 = vmatprep.subr.mxu0 0.0
  %534 = vmatpush2.xpose.msra.mxu0 0.0
  %535 = vmatprep.subr.mxu0 0.0
  %536 = vmatpush2.xpose.msra.mxu0 0.0
  %537 = vmatprep.subr.mxu0 0.0
  %538 = vmatpush2.xpose.msra.mxu0 0.0
  %539 = vmatprep.subr.mxu0 0.0
  %540 = vmatpush2.xpose.msra.mxu0 0.0
  %541 = vmatprep.subr.mxu0 0.0
  %542 = vmatpush2.xpose.msra.mxu0 0.0
  %543 = vmatprep.subr.mxu0 0.0
  %544 = vmatpush2.xpose.msra.mxu0 0.0
  %545 = vmatprep.subr.mxu0 0.0
  %546 = vmatpush2.xpose.msra.mxu0 0.0
  %547 = vmatprep.subr.mxu0 0.0
  %548 = vmatpush2.xpose.msra.mxu0 0.0
  %549 = vmatprep.subr.mxu0 0.0
  %550 = vmatpush2.xpose.msra.mxu0 0.0
  %551 = vmatprep.subr.mxu0 0.0
  %552 = vmatpush2.xpose.msra.mxu0 0.0
  %553 = vmatprep.subr.mxu0 0.0
  %554 = vmatpush2.xpose.msra.mxu0 0.0
  %555 = vmatprep.subr.mxu0 0.0
  %556 = vmatpush2.xpose.msra.mxu0 0.0
  %557 = vmatprep.subr.mxu0 0.0
  %558 = vmatpush2.xpose.msra.mxu0 0.0
  %559 = vmatprep.subr.mxu0 0.0
  %v560 = vand.u32 %v301, 4294901760
  %v561 = vsub.f32 %v301, %v560
  %v562 = vand.u32 %v561, 4294901760
  %v563 = vsub.f32 %v561, %v562
  %v564 = vand.u32 %v563, 4294901760
  %565 = vmatpush2.xpose.msra.mxu0 %v564
  %566 = vmatprep.subr.mxu0 0.0
  %v567 = vand.u32 %v298, 4294901760
  %v568 = vsub.f32 %v298, %v567
  %v569 = vand.u32 %v568, 4294901760
  %v570 = vsub.f32 %v568, %v569
  %v571 = vand.u32 %v570, 4294901760
  %572 = vmatpush2.xpose.msra.mxu0 %v571
  %573 = vmatprep.mubr.f32.mxu0 0.0
  %v574 = vand.u32 %v241, 4294901760
  %575 = vmatmul.mubr.f32.gmra.mxu0 %v574
  %v576 = vpop.f32.mrf.mxu0
  %v577 = vadd.f32 %v393, %v576
  %v578 = vpop.f32.mrf.mxu0
  %v579 = vadd.f32 %v395, %v578
  %580 = vmatprep.mubr.f32.mxu0 0.0
  %v581 = vand.u32 %v244, 4294901760
  %582 = vmatmul.mubr.f32.gmra.mxu0 %v581
  %v583 = vpop.f32.mrf.mxu0
  %v584 = vadd.f32 %v404, %v583
  %v585 = vpop.f32.mrf.mxu0
  %v586 = vadd.f32 %v406, %v585
  %587 = vmatprep.mubr.f32.mxu0 0.0
  %v588 = vand.u32 %v247, 4294901760
  %589 = vmatmul.mubr.f32.gmra.mxu0 %v588
  %v590 = vpop.f32.mrf.mxu0
  %v591 = vadd.f32 %v415, %v590
  %v592 = vpop.f32.mrf.mxu0
  %v593 = vadd.f32 %v417, %v592
  %594 = vdwg.mxu0
  %595 = vmatprep.subr.mxu0 0.0
  %v596 = vand.u32 %v295, 4294901760
  %v597 = vsub.f32 %v295, %v596
  %598 = vmatpush1.xpose.msra.mxu0 %v597
  %599 = vmatprep.subr.mxu0 0.0
  %v600 = vand.u32 %v292, 4294901760
  %v601 = vsub.f32 %v292, %v600
  %602 = vmatpush1.xpose.msra.mxu0 %v601
  %603 = vmatprep.subr.mxu0 0.0
  %v604 = vand.u32 %v289, 4294901760
  %v605 = vsub.f32 %v289, %v604
  %606 = vmatpush1.xpose.msra.mxu0 %v605
  %607 = vmatprep.subr.mxu0 0.0
  %v608 = vand.u32 %v286, 4294901760
  %v609 = vsub.f32 %v286, %v608
  %610 = vmatpush1.xpose.msra.mxu0 %v609
  %611 = vmatprep.subr.mxu0 0.0
  %v612 = vand.u32 %v283, 4294901760
  %v613 = vsub.f32 %v283, %v612
  %614 = vmatpush1.xpose.msra.mxu0 %v613
  %615 = vmatprep.subr.mxu0 0.0
  %v616 = vand.u32 %v280, 4294901760
  %v617 = vsub.f32 %v280, %v616
  %618 = vmatpush1.xpose.msra.mxu0 %v617
  %619 = vmatprep.subr.mxu0 0.0
  %v620 = vand.u32 %v277, 4294901760
  %v621 = vsub.f32 %v277, %v620
  %622 = vmatpush1.xpose.msra.mxu0 %v621
  %623 = vmatprep.subr.mxu0 0.0
  %v624 = vand.u32 %v274, 4294901760
  %v625 = vsub.f32 %v274, %v624
  %626 = vmatpush1.xpose.msra.mxu0 %v625
  %627 = vmatprep.subr.mxu0 0.0
  %v628 = vand.u32 %v271, 4294901760
  %v629 = vsub.f32 %v271, %v628
  %630 = vmatpush1.xpose.msra.mxu0 %v629
  %631 = vmatprep.subr.mxu0 0.0
  %v632 = vand.u32 %v268, 4294901760
  %v633 = vsub.f32 %v268, %v632
  %634 = vmatpush1.xpose.msra.mxu0 %v633
  %635 = vmatprep.subr.mxu0 0.0
  %v636 = vand.u32 %v265, 4294901760
  %v637 = vsub.f32 %v265, %v636
  %638 = vmatpush1.xpose.msra.mxu0 %v637
  %639 = vmatprep.subr.mxu0 0.0
  %v640 = vand.u32 %v262, 4294901760
  %v641 = vsub.f32 %v262, %v640
  %642 = vmatpush1.xpose.msra.mxu0 %v641
  %643 = vmatprep.subr.mxu0 0.0
  %v644 = vand.u32 %v259, 4294901760
  %v645 = vsub.f32 %v259, %v644
  %646 = vmatpush1.xpose.msra.mxu0 %v645
  %647 = vmatprep.subr.mxu0 0.0
  %v648 = vand.u32 %v256, 4294901760
  %v649 = vsub.f32 %v256, %v648
  %650 = vmatpush1.xpose.msra.mxu0 %v649
  %651 = vmatprep.subr.mxu0 0.0
  %v652 = vand.u32 %v253, 4294901760
  %v653 = vsub.f32 %v253, %v652
  %654 = vmatpush1.xpose.msra.mxu0 %v653
  %655 = vmatprep.subr.mxu0 0.0
  %v656 = vand.u32 %v250, 4294901760
  %v657 = vsub.f32 %v250, %v656
  %658 = vmatpush1.xpose.msra.mxu0 %v657
  %659 = vmatprep.subr.mxu0 0.0
  %660 = vmatpush2.xpose.msra.mxu0 0.0
  %661 = vmatprep.subr.mxu0 0.0
  %662 = vmatpush2.xpose.msra.mxu0 0.0
  %663 = vmatprep.subr.mxu0 0.0
  %664 = vmatpush2.xpose.msra.mxu0 0.0
  %665 = vmatprep.subr.mxu0 0.0
  %666 = vmatpush2.xpose.msra.mxu0 0.0
  %667 = vmatprep.subr.mxu0 0.0
  %668 = vmatpush2.xpose.msra.mxu0 0.0
  %669 = vmatprep.subr.mxu0 0.0
  %670 = vmatpush2.xpose.msra.mxu0 0.0
  %671 = vmatprep.subr.mxu0 0.0
  %672 = vmatpush2.xpose.msra.mxu0 0.0
  %673 = vmatprep.subr.mxu0 0.0
  %674 = vmatpush2.xpose.msra.mxu0 0.0
  %675 = vmatprep.subr.mxu0 0.0
  %676 = vmatpush2.xpose.msra.mxu0 0.0
  %677 = vmatprep.subr.mxu0 0.0
  %678 = vmatpush2.xpose.msra.mxu0 0.0
  %679 = vmatprep.subr.mxu0 0.0
  %680 = vmatpush2.xpose.msra.mxu0 0.0
  %681 = vmatprep.subr.mxu0 0.0
  %682 = vmatpush2.xpose.msra.mxu0 0.0
  %683 = vmatprep.subr.mxu0 0.0
  %684 = vmatpush2.xpose.msra.mxu0 0.0
  %685 = vmatprep.subr.mxu0 0.0
  %686 = vmatpush2.xpose.msra.mxu0 0.0
  %687 = vmatprep.subr.mxu0 0.0
  %v688 = vand.u32 %v301, 4294901760
  %v689 = vsub.f32 %v301, %v688
  %690 = vmatpush2.xpose.msra.mxu0 %v689
  %691 = vmatprep.subr.mxu0 0.0
  %v692 = vand.u32 %v298, 4294901760
  %v693 = vsub.f32 %v298, %v692
  %694 = vmatpush2.xpose.msra.mxu0 %v693
  %695 = vmatprep.mubr.f32.mxu0 0.0
  %v696 = vand.u32 %v241, 4294901760
  %v697 = vsub.f32 %v241, %v696
  %698 = vmatmul.mubr.f32.gmra.mxu0 %v697
  %v699 = vpop.f32.mrf.mxu0
  %v700 = vadd.f32 %v577, %v699
  %v701 = vpop.f32.mrf.mxu0
  %v702 = vadd.f32 %v579, %v701
  %703 = vmatprep.mubr.f32.mxu0 0.0
  %v704 = vand.u32 %v244, 4294901760
  %v705 = vsub.f32 %v244, %v704
  %706 = vmatmul.mubr.f32.gmra.mxu0 %v705
  %v707 = vpop.f32.mrf.mxu0
  %v708 = vadd.f32 %v584, %v707
  %v709 = vpop.f32.mrf.mxu0
  %v710 = vadd.f32 %v586, %v709
  %711 = vmatprep.mubr.f32.mxu0 0.0
  %v712 = vand.u32 %v247, 4294901760
  %v713 = vsub.f32 %v247, %v712
  %714 = vmatmul.mubr.f32.gmra.mxu0 %v713
  %v715 = vpop.f32.mrf.mxu0
  %v716 = vadd.f32 %v591, %v715
  %v717 = vpop.f32.mrf.mxu0
  %v718 = vadd.f32 %v593, %v717
  %719 = vdwg.mxu0
  %720 = vmatprep.subr.mxu0 0.0
  %v721 = vand.u32 %v295, 4294901760
  %722 = vmatpush1.xpose.msra.mxu0 %v721
  %723 = vmatprep.subr.mxu0 0.0
  %v724 = vand.u32 %v292, 4294901760
  %725 = vmatpush1.xpose.msra.mxu0 %v724
  %726 = vmatprep.subr.mxu0 0.0
  %v727 = vand.u32 %v289, 4294901760
  %728 = vmatpush1.xpose.msra.mxu0 %v727
  %729 = vmatprep.subr.mxu0 0.0
  %v730 = vand.u32 %v286, 4294901760
  %731 = vmatpush1.xpose.msra.mxu0 %v730
  %732 = vmatprep.subr.mxu0 0.0
  %v733 = vand.u32 %v283, 4294901760
  %734 = vmatpush1.xpose.msra.mxu0 %v733
  %735 = vmatprep.subr.mxu0 0.0
  %v736 = vand.u32 %v280, 4294901760
  %737 = vmatpush1.xpose.msra.mxu0 %v736
  %738 = vmatprep.subr.mxu0 0.0
  %v739 = vand.u32 %v277, 4294901760
  %740 = vmatpush1.xpose.msra.mxu0 %v739
  %741 = vmatprep.subr.mxu0 0.0
  %v742 = vand.u32 %v274, 4294901760
  %743 = vmatpush1.xpose.msra.mxu0 %v742
  %744 = vmatprep.subr.mxu0 0.0
  %v745 = vand.u32 %v271, 4294901760
  %746 = vmatpush1.xpose.msra.mxu0 %v745
  %747 = vmatprep.subr.mxu0 0.0
  %v748 = vand.u32 %v268, 4294901760
  %749 = vmatpush1.xpose.msra.mxu0 %v748
  %750 = vmatprep.subr.mxu0 0.0
  %v751 = vand.u32 %v265, 4294901760
  %752 = vmatpush1.xpose.msra.mxu0 %v751
  %753 = vmatprep.subr.mxu0 0.0
  %v754 = vand.u32 %v262, 4294901760
  %755 = vmatpush1.xpose.msra.mxu0 %v754
  %756 = vmatprep.subr.mxu0 0.0
  %v757 = vand.u32 %v259, 4294901760
  %758 = vmatpush1.xpose.msra.mxu0 %v757
  %759 = vmatprep.subr.mxu0 0.0
  %v760 = vand.u32 %v256, 4294901760
  %761 = vmatpush1.xpose.msra.mxu0 %v760
  %762 = vmatprep.subr.mxu0 0.0
  %v763 = vand.u32 %v253, 4294901760
  %764 = vmatpush1.xpose.msra.mxu0 %v763
  %765 = vmatprep.subr.mxu0 0.0
  %v766 = vand.u32 %v250, 4294901760
  %767 = vmatpush1.xpose.msra.mxu0 %v766
  %768 = vmatprep.subr.mxu0 0.0
  %769 = vmatpush2.xpose.msra.mxu0 0.0
  %770 = vmatprep.subr.mxu0 0.0
  %771 = vmatpush2.xpose.msra.mxu0 0.0
  %772 = vmatprep.subr.mxu0 0.0
  %773 = vmatpush2.xpose.msra.mxu0 0.0
  %774 = vmatprep.subr.mxu0 0.0
  %775 = vmatpush2.xpose.msra.mxu0 0.0
  %776 = vmatprep.subr.mxu0 0.0
  %777 = vmatpush2.xpose.msra.mxu0 0.0
  %778 = vmatprep.subr.mxu0 0.0
  %779 = vmatpush2.xpose.msra.mxu0 0.0
  %780 = vmatprep.subr.mxu0 0.0
  %781 = vmatpush2.xpose.msra.mxu0 0.0
  %782 = vmatprep.subr.mxu0 0.0
  %783 = vmatpush2.xpose.msra.mxu0 0.0
  %784 = vmatprep.subr.mxu0 0.0
  %785 = vmatpush2.xpose.msra.mxu0 0.0
  %786 = vmatprep.subr.mxu0 0.0
  %787 = vmatpush2.xpose.msra.mxu0 0.0
  %788 = vmatprep.subr.mxu0 0.0
  %789 = vmatpush2.xpose.msra.mxu0 0.0
  %790 = vmatprep.subr.mxu0 0.0
  %791 = vmatpush2.xpose.msra.mxu0 0.0
  %792 = vmatprep.subr.mxu0 0.0
  %793 = vmatpush2.xpose.msra.mxu0 0.0
  %794 = vmatprep.subr.mxu0 0.0
  %795 = vmatpush2.xpose.msra.mxu0 0.0
  %796 = vmatprep.subr.mxu0 0.0
  %v797 = vand.u32 %v301, 4294901760
  %798 = vmatpush2.xpose.msra.mxu0 %v797
  %799 = vmatprep.subr.mxu0 0.0
  %v800 = vand.u32 %v298, 4294901760
  %801 = vmatpush2.xpose.msra.mxu0 %v800
  %802 = vmatprep.mubr.f32.mxu0 0.0
  %v803 = vand.u32 %v241, 4294901760
  %v804 = vsub.f32 %v241, %v803
  %v805 = vand.u32 %v804, 4294901760
  %806 = vmatmul.mubr.f32.gmra.mxu0 %v805
  %v807 = vpop.f32.mrf.mxu0
  %v808 = vadd.f32 %v700, %v807
  %v809 = vpop.f32.mrf.mxu0
  %v810 = vadd.f32 %v702, %v809
  %811 = vmatprep.mubr.f32.mxu0 0.0
  %v812 = vand.u32 %v244, 4294901760
  %v813 = vsub.f32 %v244, %v812
  %v814 = vand.u32 %v813, 4294901760
  %815 = vmatmul.mubr.f32.gmra.mxu0 %v814
  %v816 = vpop.f32.mrf.mxu0
  %v817 = vadd.f32 %v708, %v816
  %v818 = vpop.f32.mrf.mxu0
  %v819 = vadd.f32 %v710, %v818
  %820 = vmatprep.mubr.f32.mxu0 0.0
  %v821 = vand.u32 %v247, 4294901760
  %v822 = vsub.f32 %v247, %v821
  %v823 = vand.u32 %v822, 4294901760
  %824 = vmatmul.mubr.f32.gmra.mxu0 %v823
  %v825 = vpop.f32.mrf.mxu0
  %v826 = vadd.f32 %v716, %v825
  %v827 = vpop.f32.mrf.mxu0
  %v828 = vadd.f32 %v718, %v827
  %829 = vdwg.mxu0
  %830 = vmatprep.subr.mxu0 0.0
  %v831 = vand.u32 %v295, 4294901760
  %v832 = vsub.f32 %v295, %v831
  %v833 = vand.u32 %v832, 4294901760
  %834 = vmatpush1.xpose.msra.mxu0 %v833
  %835 = vmatprep.subr.mxu0 0.0
  %v836 = vand.u32 %v292, 4294901760
  %v837 = vsub.f32 %v292, %v836
  %v838 = vand.u32 %v837, 4294901760
  %839 = vmatpush1.xpose.msra.mxu0 %v838
  %840 = vmatprep.subr.mxu0 0.0
  %v841 = vand.u32 %v289, 4294901760
  %v842 = vsub.f32 %v289, %v841
  %v843 = vand.u32 %v842, 4294901760
  %844 = vmatpush1.xpose.msra.mxu0 %v843
  %845 = vmatprep.subr.mxu0 0.0
  %v846 = vand.u32 %v286, 4294901760
  %v847 = vsub.f32 %v286, %v846
  %v848 = vand.u32 %v847, 4294901760
  %849 = vmatpush1.xpose.msra.mxu0 %v848
  %850 = vmatprep.subr.mxu0 0.0
  %v851 = vand.u32 %v283, 4294901760
  %v852 = vsub.f32 %v283, %v851
  %v853 = vand.u32 %v852, 4294901760
  %854 = vmatpush1.xpose.msra.mxu0 %v853
  %855 = vmatprep.subr.mxu0 0.0
  %v856 = vand.u32 %v280, 4294901760
  %v857 = vsub.f32 %v280, %v856
  %v858 = vand.u32 %v857, 4294901760
  %859 = vmatpush1.xpose.msra.mxu0 %v858
  %860 = vmatprep.subr.mxu0 0.0
  %v861 = vand.u32 %v277, 4294901760
  %v862 = vsub.f32 %v277, %v861
  %v863 = vand.u32 %v862, 4294901760
  %864 = vmatpush1.xpose.msra.mxu0 %v863
  %865 = vmatprep.subr.mxu0 0.0
  %v866 = vand.u32 %v274, 4294901760
  %v867 = vsub.f32 %v274, %v866
  %v868 = vand.u32 %v867, 4294901760
  %869 = vmatpush1.xpose.msra.mxu0 %v868
  %870 = vmatprep.subr.mxu0 0.0
  %v871 = vand.u32 %v271, 4294901760
  %v872 = vsub.f32 %v271, %v871
  %v873 = vand.u32 %v872, 4294901760
  %874 = vmatpush1.xpose.msra.mxu0 %v873
  %875 = vmatprep.subr.mxu0 0.0
  %v876 = vand.u32 %v268, 4294901760
  %v877 = vsub.f32 %v268, %v876
  %v878 = vand.u32 %v877, 4294901760
  %879 = vmatpush1.xpose.msra.mxu0 %v878
  %880 = vmatprep.subr.mxu0 0.0
  %v881 = vand.u32 %v265, 4294901760
  %v882 = vsub.f32 %v265, %v881
  %v883 = vand.u32 %v882, 4294901760
  %884 = vmatpush1.xpose.msra.mxu0 %v883
  %885 = vmatprep.subr.mxu0 0.0
  %v886 = vand.u32 %v262, 4294901760
  %v887 = vsub.f32 %v262, %v886
  %v888 = vand.u32 %v887, 4294901760
  %889 = vmatpush1.xpose.msra.mxu0 %v888
  %890 = vmatprep.subr.mxu0 0.0
  %v891 = vand.u32 %v259, 4294901760
  %v892 = vsub.f32 %v259, %v891
  %v893 = vand.u32 %v892, 4294901760
  %894 = vmatpush1.xpose.msra.mxu0 %v893
  %895 = vmatprep.subr.mxu0 0.0
  %v896 = vand.u32 %v256, 4294901760
  %v897 = vsub.f32 %v256, %v896
  %v898 = vand.u32 %v897, 4294901760
  %899 = vmatpush1.xpose.msra.mxu0 %v898
  %900 = vmatprep.subr.mxu0 0.0
  %v901 = vand.u32 %v253, 4294901760
  %v902 = vsub.f32 %v253, %v901
  %v903 = vand.u32 %v902, 4294901760
  %904 = vmatpush1.xpose.msra.mxu0 %v903
  %905 = vmatprep.subr.mxu0 0.0
  %v906 = vand.u32 %v250, 4294901760
  %v907 = vsub.f32 %v250, %v906
  %v908 = vand.u32 %v907, 4294901760
  %909 = vmatpush1.xpose.msra.mxu0 %v908
  %910 = vmatprep.subr.mxu0 0.0
  %911 = vmatpush2.xpose.msra.mxu0 0.0
  %912 = vmatprep.subr.mxu0 0.0
  %913 = vmatpush2.xpose.msra.mxu0 0.0
  %914 = vmatprep.subr.mxu0 0.0
  %915 = vmatpush2.xpose.msra.mxu0 0.0
  %916 = vmatprep.subr.mxu0 0.0
  %917 = vmatpush2.xpose.msra.mxu0 0.0
  %918 = vmatprep.subr.mxu0 0.0
  %919 = vmatpush2.xpose.msra.mxu0 0.0
  %920 = vmatprep.subr.mxu0 0.0
  %921 = vmatpush2.xpose.msra.mxu0 0.0
  %922 = vmatprep.subr.mxu0 0.0
  %923 = vmatpush2.xpose.msra.mxu0 0.0
  %924 = vmatprep.subr.mxu0 0.0
  %925 = vmatpush2.xpose.msra.mxu0 0.0
  %926 = vmatprep.subr.mxu0 0.0
  %927 = vmatpush2.xpose.msra.mxu0 0.0
  %928 = vmatprep.subr.mxu0 0.0
  %929 = vmatpush2.xpose.msra.mxu0 0.0
  %930 = vmatprep.subr.mxu0 0.0
  %931 = vmatpush2.xpose.msra.mxu0 0.0
  %932 = vmatprep.subr.mxu0 0.0
  %933 = vmatpush2.xpose.msra.mxu0 0.0
  %934 = vmatprep.subr.mxu0 0.0
  %935 = vmatpush2.xpose.msra.mxu0 0.0
  %936 = vmatprep.subr.mxu0 0.0
  %937 = vmatpush2.xpose.msra.mxu0 0.0
  %938 = vmatprep.subr.mxu0 0.0
  %v939 = vand.u32 %v301, 4294901760
  %v940 = vsub.f32 %v301, %v939
  %v941 = vand.u32 %v940, 4294901760
  %942 = vmatpush2.xpose.msra.mxu0 %v941
  %943 = vmatprep.subr.mxu0 0.0
  %v944 = vand.u32 %v298, 4294901760
  %v945 = vsub.f32 %v298, %v944
  %v946 = vand.u32 %v945, 4294901760
  %947 = vmatpush2.xpose.msra.mxu0 %v946
  %948 = vmatprep.mubr.f32.mxu0 0.0
  %v949 = vand.u32 %v241, 4294901760
  %950 = vmatmul.mubr.f32.gmra.mxu0 %v949
  %v951 = vpop.f32.mrf.mxu0
  %v952 = vadd.f32 %v808, %v951
  %v953 = vpop.f32.mrf.mxu0
  %v954 = vadd.f32 %v810, %v953
  %955 = vmatprep.mubr.f32.mxu0 0.0
  %v956 = vand.u32 %v244, 4294901760
  %957 = vmatmul.mubr.f32.gmra.mxu0 %v956
  %v958 = vpop.f32.mrf.mxu0
  %v959 = vadd.f32 %v817, %v958
  %v960 = vpop.f32.mrf.mxu0
  %v961 = vadd.f32 %v819, %v960
  %962 = vmatprep.mubr.f32.mxu0 0.0
  %v963 = vand.u32 %v247, 4294901760
  %964 = vmatmul.mubr.f32.gmra.mxu0 %v963
  %v965 = vpop.f32.mrf.mxu0
  %v966 = vadd.f32 %v826, %v965
  %v967 = vpop.f32.mrf.mxu0
  %v968 = vadd.f32 %v828, %v967
  %969 = vdwg.mxu0
  %970 = vmatprep.subr.mxu0 0.0
  %v971 = vand.u32 %v295, 4294901760
  %972 = vmatpush1.xpose.msra.mxu0 %v971
  %973 = vmatprep.subr.mxu0 0.0
  %v974 = vand.u32 %v292, 4294901760
  %975 = vmatpush1.xpose.msra.mxu0 %v974
  %976 = vmatprep.subr.mxu0 0.0
  %v977 = vand.u32 %v289, 4294901760
  %978 = vmatpush1.xpose.msra.mxu0 %v977
  %979 = vmatprep.subr.mxu0 0.0
  %v980 = vand.u32 %v286, 4294901760
  %981 = vmatpush1.xpose.msra.mxu0 %v980
  %982 = vmatprep.subr.mxu0 0.0
  %v983 = vand.u32 %v283, 4294901760
  %984 = vmatpush1.xpose.msra.mxu0 %v983
  %985 = vmatprep.subr.mxu0 0.0
  %v986 = vand.u32 %v280, 4294901760
  %987 = vmatpush1.xpose.msra.mxu0 %v986
  %988 = vmatprep.subr.mxu0 0.0
  %v989 = vand.u32 %v277, 4294901760
  %990 = vmatpush1.xpose.msra.mxu0 %v989
  %991 = vmatprep.subr.mxu0 0.0
  %v992 = vand.u32 %v274, 4294901760
  %993 = vmatpush1.xpose.msra.mxu0 %v992
  %994 = vmatprep.subr.mxu0 0.0
  %v995 = vand.u32 %v271, 4294901760
  %996 = vmatpush1.xpose.msra.mxu0 %v995
  %997 = vmatprep.subr.mxu0 0.0
  %v998 = vand.u32 %v268, 4294901760
  %999 = vmatpush1.xpose.msra.mxu0 %v998
  %1000 = vmatprep.subr.mxu0 0.0
  %v1001 = vand.u32 %v265, 4294901760
  %1002 = vmatpush1.xpose.msra.mxu0 %v1001
  %1003 = vmatprep.subr.mxu0 0.0
  %v1004 = vand.u32 %v262, 4294901760
  %1005 = vmatpush1.xpose.msra.mxu0 %v1004
  %1006 = vmatprep.subr.mxu0 0.0
  %v1007 = vand.u32 %v259, 4294901760
  %1008 = vmatpush1.xpose.msra.mxu0 %v1007
  %1009 = vmatprep.subr.mxu0 0.0
  %v1010 = vand.u32 %v256, 4294901760
  %1011 = vmatpush1.xpose.msra.mxu0 %v1010
  %1012 = vmatprep.subr.mxu0 0.0
  %v1013 = vand.u32 %v253, 4294901760
  %1014 = vmatpush1.xpose.msra.mxu0 %v1013
  %1015 = vmatprep.subr.mxu0 0.0
  %v1016 = vand.u32 %v250, 4294901760
  %1017 = vmatpush1.xpose.msra.mxu0 %v1016
  %1018 = vmatprep.subr.mxu0 0.0
  %1019 = vmatpush2.xpose.msra.mxu0 0.0
  %1020 = vmatprep.subr.mxu0 0.0
  %1021 = vmatpush2.xpose.msra.mxu0 0.0
  %1022 = vmatprep.subr.mxu0 0.0
  %1023 = vmatpush2.xpose.msra.mxu0 0.0
  %1024 = vmatprep.subr.mxu0 0.0
  %1025 = vmatpush2.xpose.msra.mxu0 0.0
  %1026 = vmatprep.subr.mxu0 0.0
  %1027 = vmatpush2.xpose.msra.mxu0 0.0
  %1028 = vmatprep.subr.mxu0 0.0
  %1029 = vmatpush2.xpose.msra.mxu0 0.0
  %1030 = vmatprep.subr.mxu0 0.0
  %1031 = vmatpush2.xpose.msra.mxu0 0.0
  %1032 = vmatprep.subr.mxu0 0.0
  %1033 = vmatpush2.xpose.msra.mxu0 0.0
  %1034 = vmatprep.subr.mxu0 0.0
  %1035 = vmatpush2.xpose.msra.mxu0 0.0
  %1036 = vmatprep.subr.mxu0 0.0
  %1037 = vmatpush2.xpose.msra.mxu0 0.0
  %1038 = vmatprep.subr.mxu0 0.0
  %1039 = vmatpush2.xpose.msra.mxu0 0.0
  %1040 = vmatprep.subr.mxu0 0.0
  %1041 = vmatpush2.xpose.msra.mxu0 0.0
  %1042 = vmatprep.subr.mxu0 0.0
  %1043 = vmatpush2.xpose.msra.mxu0 0.0
  %1044 = vmatprep.subr.mxu0 0.0
  %1045 = vmatpush2.xpose.msra.mxu0 0.0
  %1046 = vmatprep.subr.mxu0 0.0
  %v1047 = vand.u32 %v301, 4294901760
  %1048 = vmatpush2.xpose.msra.mxu0 %v1047
  %1049 = vmatprep.subr.mxu0 0.0
  %v1050 = vand.u32 %v298, 4294901760
  %1051 = vmatpush2.xpose.msra.mxu0 %v1050
  %1052 = vmatprep.mubr.f32.mxu0 0.0
  %v1053 = vand.u32 %v241, 4294901760
  %1054 = vmatmul.mubr.f32.gmra.mxu0 %v1053
  %v1055 = vpop.f32.mrf.mxu0
  %v1056 = vadd.f32 %v952, %v1055
  %v1057 = vpop.f32.mrf.mxu0
  %v1058 = vadd.f32 %v954, %v1057
  %1059 = vmatprep.mubr.f32.mxu0 0.0
  %v1060 = vand.u32 %v244, 4294901760
  %1061 = vmatmul.mubr.f32.gmra.mxu0 %v1060
  %v1062 = vpop.f32.mrf.mxu0
  %v1063 = vadd.f32 %v959, %v1062
  %v1064 = vpop.f32.mrf.mxu0
  %v1065 = vadd.f32 %v961, %v1064
  %1066 = vmatprep.mubr.f32.mxu0 0.0
  %v1067 = vand.u32 %v247, 4294901760
  %1068 = vmatmul.mubr.f32.gmra.mxu0 %v1067
  %v1069 = vpop.f32.mrf.mxu0
  %v1070 = vadd.f32 %v966, %v1069
  %v1071 = vpop.f32.mrf.mxu0
  %v1072 = vadd.f32 %v968, %v1071
  %1073 = vdwg.mxu0
  %v1075 = vsel %vm239, %v11, 0
  %v1078 = vsel %vm239, %v12, 0
  %v1081 = vsel %vm239, %v13, 0
  %v1084 = vsel %vm239, %v221, 0
  %v1087 = vsel %vm239, %v222, 0
  %v1090 = vsel %vm239, %v223, 0
  %v1093 = vsel %vm239, %v224, 0
  %v1096 = vsel %vm239, %v225, 0
  %v1099 = vsel %vm239, %v226, 0
  %v1102 = vsel %vm239, %v227, 0
  %v1105 = vsel %vm239, %v228, 0
  %v1108 = vsel %vm239, %v229, 0
  %v1111 = vsel %vm239, %v230, 0
  %v1114 = vsel %vm239, %v231, 0
  %v1117 = vsel %vm239, %v232, 0
  %v1120 = vsel %vm239, %v233, 0
  %v1123 = vsel %vm239, %v234, 0
  %v1126 = vsel %vm239, %v235, 0
  %v1129 = vsel %vm239, %v236, 0
  %v1132 = vsel %vm239, %v237, 0
  %v1135 = vsel %vm239, %v238, 0
  %1137 = vmatprep.subr.mxu0 0.0
  %v1138 = vand.u32 %v1129, 4294901760
  %1139 = vmatpush1.xpose.msra.mxu0 %v1138
  %1140 = vmatprep.subr.mxu0 0.0
  %v1141 = vand.u32 %v1126, 4294901760
  %1142 = vmatpush1.xpose.msra.mxu0 %v1141
  %1143 = vmatprep.subr.mxu0 0.0
  %v1144 = vand.u32 %v1123, 4294901760
  %1145 = vmatpush1.xpose.msra.mxu0 %v1144
  %1146 = vmatprep.subr.mxu0 0.0
  %v1147 = vand.u32 %v1120, 4294901760
  %1148 = vmatpush1.xpose.msra.mxu0 %v1147
  %1149 = vmatprep.subr.mxu0 0.0
  %v1150 = vand.u32 %v1117, 4294901760
  %1151 = vmatpush1.xpose.msra.mxu0 %v1150
  %1152 = vmatprep.subr.mxu0 0.0
  %v1153 = vand.u32 %v1114, 4294901760
  %1154 = vmatpush1.xpose.msra.mxu0 %v1153
  %1155 = vmatprep.subr.mxu0 0.0
  %v1156 = vand.u32 %v1111, 4294901760
  %1157 = vmatpush1.xpose.msra.mxu0 %v1156
  %1158 = vmatprep.subr.mxu0 0.0
  %v1159 = vand.u32 %v1108, 4294901760
  %1160 = vmatpush1.xpose.msra.mxu0 %v1159
  %1161 = vmatprep.subr.mxu0 0.0
  %v1162 = vand.u32 %v1105, 4294901760
  %1163 = vmatpush1.xpose.msra.mxu0 %v1162
  %1164 = vmatprep.subr.mxu0 0.0
  %v1165 = vand.u32 %v1102, 4294901760
  %1166 = vmatpush1.xpose.msra.mxu0 %v1165
  %1167 = vmatprep.subr.mxu0 0.0
  %v1168 = vand.u32 %v1099, 4294901760
  %1169 = vmatpush1.xpose.msra.mxu0 %v1168
  %1170 = vmatprep.subr.mxu0 0.0
  %v1171 = vand.u32 %v1096, 4294901760
  %1172 = vmatpush1.xpose.msra.mxu0 %v1171
  %1173 = vmatprep.subr.mxu0 0.0
  %v1174 = vand.u32 %v1093, 4294901760
  %1175 = vmatpush1.xpose.msra.mxu0 %v1174
  %1176 = vmatprep.subr.mxu0 0.0
  %v1177 = vand.u32 %v1090, 4294901760
  %1178 = vmatpush1.xpose.msra.mxu0 %v1177
  %1179 = vmatprep.subr.mxu0 0.0
  %v1180 = vand.u32 %v1087, 4294901760
  %1181 = vmatpush1.xpose.msra.mxu0 %v1180
  %1182 = vmatprep.subr.mxu0 0.0
  %v1183 = vand.u32 %v1084, 4294901760
  %1184 = vmatpush1.xpose.msra.mxu0 %v1183
  %1185 = vmatprep.subr.mxu0 0.0
  %1186 = vmatpush2.xpose.msra.mxu0 0.0
  %1187 = vmatprep.subr.mxu0 0.0
  %1188 = vmatpush2.xpose.msra.mxu0 0.0
  %1189 = vmatprep.subr.mxu0 0.0
  %1190 = vmatpush2.xpose.msra.mxu0 0.0
  %1191 = vmatprep.subr.mxu0 0.0
  %1192 = vmatpush2.xpose.msra.mxu0 0.0
  %1193 = vmatprep.subr.mxu0 0.0
  %1194 = vmatpush2.xpose.msra.mxu0 0.0
  %1195 = vmatprep.subr.mxu0 0.0
  %1196 = vmatpush2.xpose.msra.mxu0 0.0
  %1197 = vmatprep.subr.mxu0 0.0
  %1198 = vmatpush2.xpose.msra.mxu0 0.0
  %1199 = vmatprep.subr.mxu0 0.0
  %1200 = vmatpush2.xpose.msra.mxu0 0.0
  %1201 = vmatprep.subr.mxu0 0.0
  %1202 = vmatpush2.xpose.msra.mxu0 0.0
  %1203 = vmatprep.subr.mxu0 0.0
  %1204 = vmatpush2.xpose.msra.mxu0 0.0
  %1205 = vmatprep.subr.mxu0 0.0
  %1206 = vmatpush2.xpose.msra.mxu0 0.0
  %1207 = vmatprep.subr.mxu0 0.0
  %1208 = vmatpush2.xpose.msra.mxu0 0.0
  %1209 = vmatprep.subr.mxu0 0.0
  %1210 = vmatpush2.xpose.msra.mxu0 0.0
  %1211 = vmatprep.subr.mxu0 0.0
  %1212 = vmatpush2.xpose.msra.mxu0 0.0
  %1213 = vmatprep.subr.mxu0 0.0
  %v1214 = vand.u32 %v1135, 4294901760
  %1215 = vmatpush2.xpose.msra.mxu0 %v1214
  %1216 = vmatprep.subr.mxu0 0.0
  %v1217 = vand.u32 %v1132, 4294901760
  %1218 = vmatpush2.xpose.msra.mxu0 %v1217
  %1219 = vmatprep.mubr.f32.mxu0 0.0
  %v1220 = vand.u32 %v1075, 4294901760
  %v1221 = vsub.f32 %v1075, %v1220
  %v1222 = vand.u32 %v1221, 4294901760
  %v1223 = vsub.f32 %v1221, %v1222
  %v1224 = vand.u32 %v1223, 4294901760
  %1225 = vmatmul.mubr.f32.gmra.mxu0 %v1224
  %v1226 = vpop.f32.mrf.mxu0
  %v1227 = vadd.f32 0.0, %v1226
  %v1228 = vpop.f32.mrf.mxu0
  %v1229 = vadd.f32 0.0, %v1228
  %1230 = vmatprep.mubr.f32.mxu0 0.0
  %v1231 = vand.u32 %v1078, 4294901760
  %v1232 = vsub.f32 %v1078, %v1231
  %v1233 = vand.u32 %v1232, 4294901760
  %v1234 = vsub.f32 %v1232, %v1233
  %v1235 = vand.u32 %v1234, 4294901760
  %1236 = vmatmul.mubr.f32.gmra.mxu0 %v1235
  %v1237 = vpop.f32.mrf.mxu0
  %v1238 = vadd.f32 0.0, %v1237
  %v1239 = vpop.f32.mrf.mxu0
  %v1240 = vadd.f32 0.0, %v1239
  %1241 = vmatprep.mubr.f32.mxu0 0.0
  %v1242 = vand.u32 %v1081, 4294901760
  %v1243 = vsub.f32 %v1081, %v1242
  %v1244 = vand.u32 %v1243, 4294901760
  %v1245 = vsub.f32 %v1243, %v1244
  %v1246 = vand.u32 %v1245, 4294901760
  %1247 = vmatmul.mubr.f32.gmra.mxu0 %v1246
  %v1248 = vpop.f32.mrf.mxu0
  %v1249 = vadd.f32 0.0, %v1248
  %v1250 = vpop.f32.mrf.mxu0
  %v1251 = vadd.f32 0.0, %v1250
  %1252 = vdwg.mxu0
  %1253 = vmatprep.subr.mxu0 0.0
  %v1254 = vand.u32 %v1129, 4294901760
  %v1255 = vsub.f32 %v1129, %v1254
  %v1256 = vand.u32 %v1255, 4294901760
  %v1257 = vsub.f32 %v1255, %v1256
  %v1258 = vand.u32 %v1257, 4294901760
  %1259 = vmatpush1.xpose.msra.mxu0 %v1258
  %1260 = vmatprep.subr.mxu0 0.0
  %v1261 = vand.u32 %v1126, 4294901760
  %v1262 = vsub.f32 %v1126, %v1261
  %v1263 = vand.u32 %v1262, 4294901760
  %v1264 = vsub.f32 %v1262, %v1263
  %v1265 = vand.u32 %v1264, 4294901760
  %1266 = vmatpush1.xpose.msra.mxu0 %v1265
  %1267 = vmatprep.subr.mxu0 0.0
  %v1268 = vand.u32 %v1123, 4294901760
  %v1269 = vsub.f32 %v1123, %v1268
  %v1270 = vand.u32 %v1269, 4294901760
  %v1271 = vsub.f32 %v1269, %v1270
  %v1272 = vand.u32 %v1271, 4294901760
  %1273 = vmatpush1.xpose.msra.mxu0 %v1272
  %1274 = vmatprep.subr.mxu0 0.0
  %v1275 = vand.u32 %v1120, 4294901760
  %v1276 = vsub.f32 %v1120, %v1275
  %v1277 = vand.u32 %v1276, 4294901760
  %v1278 = vsub.f32 %v1276, %v1277
  %v1279 = vand.u32 %v1278, 4294901760
  %1280 = vmatpush1.xpose.msra.mxu0 %v1279
  %1281 = vmatprep.subr.mxu0 0.0
  %v1282 = vand.u32 %v1117, 4294901760
  %v1283 = vsub.f32 %v1117, %v1282
  %v1284 = vand.u32 %v1283, 4294901760
  %v1285 = vsub.f32 %v1283, %v1284
  %v1286 = vand.u32 %v1285, 4294901760
  %1287 = vmatpush1.xpose.msra.mxu0 %v1286
  %1288 = vmatprep.subr.mxu0 0.0
  %v1289 = vand.u32 %v1114, 4294901760
  %v1290 = vsub.f32 %v1114, %v1289
  %v1291 = vand.u32 %v1290, 4294901760
  %v1292 = vsub.f32 %v1290, %v1291
  %v1293 = vand.u32 %v1292, 4294901760
  %1294 = vmatpush1.xpose.msra.mxu0 %v1293
  %1295 = vmatprep.subr.mxu0 0.0
  %v1296 = vand.u32 %v1111, 4294901760
  %v1297 = vsub.f32 %v1111, %v1296
  %v1298 = vand.u32 %v1297, 4294901760
  %v1299 = vsub.f32 %v1297, %v1298
  %v1300 = vand.u32 %v1299, 4294901760
  %1301 = vmatpush1.xpose.msra.mxu0 %v1300
  %1302 = vmatprep.subr.mxu0 0.0
  %v1303 = vand.u32 %v1108, 4294901760
  %v1304 = vsub.f32 %v1108, %v1303
  %v1305 = vand.u32 %v1304, 4294901760
  %v1306 = vsub.f32 %v1304, %v1305
  %v1307 = vand.u32 %v1306, 4294901760
  %1308 = vmatpush1.xpose.msra.mxu0 %v1307
  %1309 = vmatprep.subr.mxu0 0.0
  %v1310 = vand.u32 %v1105, 4294901760
  %v1311 = vsub.f32 %v1105, %v1310
  %v1312 = vand.u32 %v1311, 4294901760
  %v1313 = vsub.f32 %v1311, %v1312
  %v1314 = vand.u32 %v1313, 4294901760
  %1315 = vmatpush1.xpose.msra.mxu0 %v1314
  %1316 = vmatprep.subr.mxu0 0.0
  %v1317 = vand.u32 %v1102, 4294901760
  %v1318 = vsub.f32 %v1102, %v1317
  %v1319 = vand.u32 %v1318, 4294901760
  %v1320 = vsub.f32 %v1318, %v1319
  %v1321 = vand.u32 %v1320, 4294901760
  %1322 = vmatpush1.xpose.msra.mxu0 %v1321
  %1323 = vmatprep.subr.mxu0 0.0
  %v1324 = vand.u32 %v1099, 4294901760
  %v1325 = vsub.f32 %v1099, %v1324
  %v1326 = vand.u32 %v1325, 4294901760
  %v1327 = vsub.f32 %v1325, %v1326
  %v1328 = vand.u32 %v1327, 4294901760
  %1329 = vmatpush1.xpose.msra.mxu0 %v1328
  %1330 = vmatprep.subr.mxu0 0.0
  %v1331 = vand.u32 %v1096, 4294901760
  %v1332 = vsub.f32 %v1096, %v1331
  %v1333 = vand.u32 %v1332, 4294901760
  %v1334 = vsub.f32 %v1332, %v1333
  %v1335 = vand.u32 %v1334, 4294901760
  %1336 = vmatpush1.xpose.msra.mxu0 %v1335
  %1337 = vmatprep.subr.mxu0 0.0
  %v1338 = vand.u32 %v1093, 4294901760
  %v1339 = vsub.f32 %v1093, %v1338
  %v1340 = vand.u32 %v1339, 4294901760
  %v1341 = vsub.f32 %v1339, %v1340
  %v1342 = vand.u32 %v1341, 4294901760
  %1343 = vmatpush1.xpose.msra.mxu0 %v1342
  %1344 = vmatprep.subr.mxu0 0.0
  %v1345 = vand.u32 %v1090, 4294901760
  %v1346 = vsub.f32 %v1090, %v1345
  %v1347 = vand.u32 %v1346, 4294901760
  %v1348 = vsub.f32 %v1346, %v1347
  %v1349 = vand.u32 %v1348, 4294901760
  %1350 = vmatpush1.xpose.msra.mxu0 %v1349
  %1351 = vmatprep.subr.mxu0 0.0
  %v1352 = vand.u32 %v1087, 4294901760
  %v1353 = vsub.f32 %v1087, %v1352
  %v1354 = vand.u32 %v1353, 4294901760
  %v1355 = vsub.f32 %v1353, %v1354
  %v1356 = vand.u32 %v1355, 4294901760
  %1357 = vmatpush1.xpose.msra.mxu0 %v1356
  %1358 = vmatprep.subr.mxu0 0.0
  %v1359 = vand.u32 %v1084, 4294901760
  %v1360 = vsub.f32 %v1084, %v1359
  %v1361 = vand.u32 %v1360, 4294901760
  %v1362 = vsub.f32 %v1360, %v1361
  %v1363 = vand.u32 %v1362, 4294901760
  %1364 = vmatpush1.xpose.msra.mxu0 %v1363
  %1365 = vmatprep.subr.mxu0 0.0
  %1366 = vmatpush2.xpose.msra.mxu0 0.0
  %1367 = vmatprep.subr.mxu0 0.0
  %1368 = vmatpush2.xpose.msra.mxu0 0.0
  %1369 = vmatprep.subr.mxu0 0.0
  %1370 = vmatpush2.xpose.msra.mxu0 0.0
  %1371 = vmatprep.subr.mxu0 0.0
  %1372 = vmatpush2.xpose.msra.mxu0 0.0
  %1373 = vmatprep.subr.mxu0 0.0
  %1374 = vmatpush2.xpose.msra.mxu0 0.0
  %1375 = vmatprep.subr.mxu0 0.0
  %1376 = vmatpush2.xpose.msra.mxu0 0.0
  %1377 = vmatprep.subr.mxu0 0.0
  %1378 = vmatpush2.xpose.msra.mxu0 0.0
  %1379 = vmatprep.subr.mxu0 0.0
  %1380 = vmatpush2.xpose.msra.mxu0 0.0
  %1381 = vmatprep.subr.mxu0 0.0
  %1382 = vmatpush2.xpose.msra.mxu0 0.0
  %1383 = vmatprep.subr.mxu0 0.0
  %1384 = vmatpush2.xpose.msra.mxu0 0.0
  %1385 = vmatprep.subr.mxu0 0.0
  %1386 = vmatpush2.xpose.msra.mxu0 0.0
  %1387 = vmatprep.subr.mxu0 0.0
  %1388 = vmatpush2.xpose.msra.mxu0 0.0
  %1389 = vmatprep.subr.mxu0 0.0
  %1390 = vmatpush2.xpose.msra.mxu0 0.0
  %1391 = vmatprep.subr.mxu0 0.0
  %1392 = vmatpush2.xpose.msra.mxu0 0.0
  %1393 = vmatprep.subr.mxu0 0.0
  %v1394 = vand.u32 %v1135, 4294901760
  %v1395 = vsub.f32 %v1135, %v1394
  %v1396 = vand.u32 %v1395, 4294901760
  %v1397 = vsub.f32 %v1395, %v1396
  %v1398 = vand.u32 %v1397, 4294901760
  %1399 = vmatpush2.xpose.msra.mxu0 %v1398
  %1400 = vmatprep.subr.mxu0 0.0
  %v1401 = vand.u32 %v1132, 4294901760
  %v1402 = vsub.f32 %v1132, %v1401
  %v1403 = vand.u32 %v1402, 4294901760
  %v1404 = vsub.f32 %v1402, %v1403
  %v1405 = vand.u32 %v1404, 4294901760
  %1406 = vmatpush2.xpose.msra.mxu0 %v1405
  %1407 = vmatprep.mubr.f32.mxu0 0.0
  %v1408 = vand.u32 %v1075, 4294901760
  %1409 = vmatmul.mubr.f32.gmra.mxu0 %v1408
  %v1410 = vpop.f32.mrf.mxu0
  %v1411 = vadd.f32 %v1227, %v1410
  %v1412 = vpop.f32.mrf.mxu0
  %v1413 = vadd.f32 %v1229, %v1412
  %1414 = vmatprep.mubr.f32.mxu0 0.0
  %v1415 = vand.u32 %v1078, 4294901760
  %1416 = vmatmul.mubr.f32.gmra.mxu0 %v1415
  %v1417 = vpop.f32.mrf.mxu0
  %v1418 = vadd.f32 %v1238, %v1417
  %v1419 = vpop.f32.mrf.mxu0
  %v1420 = vadd.f32 %v1240, %v1419
  %1421 = vmatprep.mubr.f32.mxu0 0.0
  %v1422 = vand.u32 %v1081, 4294901760
  %1423 = vmatmul.mubr.f32.gmra.mxu0 %v1422
  %v1424 = vpop.f32.mrf.mxu0
  %v1425 = vadd.f32 %v1249, %v1424
  %v1426 = vpop.f32.mrf.mxu0
  %v1427 = vadd.f32 %v1251, %v1426
  %1428 = vdwg.mxu0
  %1429 = vmatprep.subr.mxu0 0.0
  %v1430 = vand.u32 %v1129, 4294901760
  %v1431 = vsub.f32 %v1129, %v1430
  %1432 = vmatpush1.xpose.msra.mxu0 %v1431
  %1433 = vmatprep.subr.mxu0 0.0
  %v1434 = vand.u32 %v1126, 4294901760
  %v1435 = vsub.f32 %v1126, %v1434
  %1436 = vmatpush1.xpose.msra.mxu0 %v1435
  %1437 = vmatprep.subr.mxu0 0.0
  %v1438 = vand.u32 %v1123, 4294901760
  %v1439 = vsub.f32 %v1123, %v1438
  %1440 = vmatpush1.xpose.msra.mxu0 %v1439
  %1441 = vmatprep.subr.mxu0 0.0
  %v1442 = vand.u32 %v1120, 4294901760
  %v1443 = vsub.f32 %v1120, %v1442
  %1444 = vmatpush1.xpose.msra.mxu0 %v1443
  %1445 = vmatprep.subr.mxu0 0.0
  %v1446 = vand.u32 %v1117, 4294901760
  %v1447 = vsub.f32 %v1117, %v1446
  %1448 = vmatpush1.xpose.msra.mxu0 %v1447
  %1449 = vmatprep.subr.mxu0 0.0
  %v1450 = vand.u32 %v1114, 4294901760
  %v1451 = vsub.f32 %v1114, %v1450
  %1452 = vmatpush1.xpose.msra.mxu0 %v1451
  %1453 = vmatprep.subr.mxu0 0.0
  %v1454 = vand.u32 %v1111, 4294901760
  %v1455 = vsub.f32 %v1111, %v1454
  %1456 = vmatpush1.xpose.msra.mxu0 %v1455
  %1457 = vmatprep.subr.mxu0 0.0
  %v1458 = vand.u32 %v1108, 4294901760
  %v1459 = vsub.f32 %v1108, %v1458
  %1460 = vmatpush1.xpose.msra.mxu0 %v1459
  %1461 = vmatprep.subr.mxu0 0.0
  %v1462 = vand.u32 %v1105, 4294901760
  %v1463 = vsub.f32 %v1105, %v1462
  %1464 = vmatpush1.xpose.msra.mxu0 %v1463
  %1465 = vmatprep.subr.mxu0 0.0
  %v1466 = vand.u32 %v1102, 4294901760
  %v1467 = vsub.f32 %v1102, %v1466
  %1468 = vmatpush1.xpose.msra.mxu0 %v1467
  %1469 = vmatprep.subr.mxu0 0.0
  %v1470 = vand.u32 %v1099, 4294901760
  %v1471 = vsub.f32 %v1099, %v1470
  %1472 = vmatpush1.xpose.msra.mxu0 %v1471
  %1473 = vmatprep.subr.mxu0 0.0
  %v1474 = vand.u32 %v1096, 4294901760
  %v1475 = vsub.f32 %v1096, %v1474
  %1476 = vmatpush1.xpose.msra.mxu0 %v1475
  %1477 = vmatprep.subr.mxu0 0.0
  %v1478 = vand.u32 %v1093, 4294901760
  %v1479 = vsub.f32 %v1093, %v1478
  %1480 = vmatpush1.xpose.msra.mxu0 %v1479
  %1481 = vmatprep.subr.mxu0 0.0
  %v1482 = vand.u32 %v1090, 4294901760
  %v1483 = vsub.f32 %v1090, %v1482
  %1484 = vmatpush1.xpose.msra.mxu0 %v1483
  %1485 = vmatprep.subr.mxu0 0.0
  %v1486 = vand.u32 %v1087, 4294901760
  %v1487 = vsub.f32 %v1087, %v1486
  %1488 = vmatpush1.xpose.msra.mxu0 %v1487
  %1489 = vmatprep.subr.mxu0 0.0
  %v1490 = vand.u32 %v1084, 4294901760
  %v1491 = vsub.f32 %v1084, %v1490
  %1492 = vmatpush1.xpose.msra.mxu0 %v1491
  %1493 = vmatprep.subr.mxu0 0.0
  %1494 = vmatpush2.xpose.msra.mxu0 0.0
  %1495 = vmatprep.subr.mxu0 0.0
  %1496 = vmatpush2.xpose.msra.mxu0 0.0
  %1497 = vmatprep.subr.mxu0 0.0
  %1498 = vmatpush2.xpose.msra.mxu0 0.0
  %1499 = vmatprep.subr.mxu0 0.0
  %1500 = vmatpush2.xpose.msra.mxu0 0.0
  %1501 = vmatprep.subr.mxu0 0.0
  %1502 = vmatpush2.xpose.msra.mxu0 0.0
  %1503 = vmatprep.subr.mxu0 0.0
  %1504 = vmatpush2.xpose.msra.mxu0 0.0
  %1505 = vmatprep.subr.mxu0 0.0
  %1506 = vmatpush2.xpose.msra.mxu0 0.0
  %1507 = vmatprep.subr.mxu0 0.0
  %1508 = vmatpush2.xpose.msra.mxu0 0.0
  %1509 = vmatprep.subr.mxu0 0.0
  %1510 = vmatpush2.xpose.msra.mxu0 0.0
  %1511 = vmatprep.subr.mxu0 0.0
  %1512 = vmatpush2.xpose.msra.mxu0 0.0
  %1513 = vmatprep.subr.mxu0 0.0
  %1514 = vmatpush2.xpose.msra.mxu0 0.0
  %1515 = vmatprep.subr.mxu0 0.0
  %1516 = vmatpush2.xpose.msra.mxu0 0.0
  %1517 = vmatprep.subr.mxu0 0.0
  %1518 = vmatpush2.xpose.msra.mxu0 0.0
  %1519 = vmatprep.subr.mxu0 0.0
  %1520 = vmatpush2.xpose.msra.mxu0 0.0
  %1521 = vmatprep.subr.mxu0 0.0
  %v1522 = vand.u32 %v1135, 4294901760
  %v1523 = vsub.f32 %v1135, %v1522
  %1524 = vmatpush2.xpose.msra.mxu0 %v1523
  %1525 = vmatprep.subr.mxu0 0.0
  %v1526 = vand.u32 %v1132, 4294901760
  %v1527 = vsub.f32 %v1132, %v1526
  %1528 = vmatpush2.xpose.msra.mxu0 %v1527
  %1529 = vmatprep.mubr.f32.mxu0 0.0
  %v1530 = vand.u32 %v1075, 4294901760
  %v1531 = vsub.f32 %v1075, %v1530
  %1532 = vmatmul.mubr.f32.gmra.mxu0 %v1531
  %v1533 = vpop.f32.mrf.mxu0
  %v1534 = vadd.f32 %v1411, %v1533
  %v1535 = vpop.f32.mrf.mxu0
  %v1536 = vadd.f32 %v1413, %v1535
  %1537 = vmatprep.mubr.f32.mxu0 0.0
  %v1538 = vand.u32 %v1078, 4294901760
  %v1539 = vsub.f32 %v1078, %v1538
  %1540 = vmatmul.mubr.f32.gmra.mxu0 %v1539
  %v1541 = vpop.f32.mrf.mxu0
  %v1542 = vadd.f32 %v1418, %v1541
  %v1543 = vpop.f32.mrf.mxu0
  %v1544 = vadd.f32 %v1420, %v1543
  %1545 = vmatprep.mubr.f32.mxu0 0.0
  %v1546 = vand.u32 %v1081, 4294901760
  %v1547 = vsub.f32 %v1081, %v1546
  %1548 = vmatmul.mubr.f32.gmra.mxu0 %v1547
  %v1549 = vpop.f32.mrf.mxu0
  %v1550 = vadd.f32 %v1425, %v1549
  %v1551 = vpop.f32.mrf.mxu0
  %v1552 = vadd.f32 %v1427, %v1551
  %1553 = vdwg.mxu0
  %1554 = vmatprep.subr.mxu0 0.0
  %v1555 = vand.u32 %v1129, 4294901760
  %1556 = vmatpush1.xpose.msra.mxu0 %v1555
  %1557 = vmatprep.subr.mxu0 0.0
  %v1558 = vand.u32 %v1126, 4294901760
  %1559 = vmatpush1.xpose.msra.mxu0 %v1558
  %1560 = vmatprep.subr.mxu0 0.0
  %v1561 = vand.u32 %v1123, 4294901760
  %1562 = vmatpush1.xpose.msra.mxu0 %v1561
  %1563 = vmatprep.subr.mxu0 0.0
  %v1564 = vand.u32 %v1120, 4294901760
  %1565 = vmatpush1.xpose.msra.mxu0 %v1564
  %1566 = vmatprep.subr.mxu0 0.0
  %v1567 = vand.u32 %v1117, 4294901760
  %1568 = vmatpush1.xpose.msra.mxu0 %v1567
  %1569 = vmatprep.subr.mxu0 0.0
  %v1570 = vand.u32 %v1114, 4294901760
  %1571 = vmatpush1.xpose.msra.mxu0 %v1570
  %1572 = vmatprep.subr.mxu0 0.0
  %v1573 = vand.u32 %v1111, 4294901760
  %1574 = vmatpush1.xpose.msra.mxu0 %v1573
  %1575 = vmatprep.subr.mxu0 0.0
  %v1576 = vand.u32 %v1108, 4294901760
  %1577 = vmatpush1.xpose.msra.mxu0 %v1576
  %1578 = vmatprep.subr.mxu0 0.0
  %v1579 = vand.u32 %v1105, 4294901760
  %1580 = vmatpush1.xpose.msra.mxu0 %v1579
  %1581 = vmatprep.subr.mxu0 0.0
  %v1582 = vand.u32 %v1102, 4294901760
  %1583 = vmatpush1.xpose.msra.mxu0 %v1582
  %1584 = vmatprep.subr.mxu0 0.0
  %v1585 = vand.u32 %v1099, 4294901760
  %1586 = vmatpush1.xpose.msra.mxu0 %v1585
  %1587 = vmatprep.subr.mxu0 0.0
  %v1588 = vand.u32 %v1096, 4294901760
  %1589 = vmatpush1.xpose.msra.mxu0 %v1588
  %1590 = vmatprep.subr.mxu0 0.0
  %v1591 = vand.u32 %v1093, 4294901760
  %1592 = vmatpush1.xpose.msra.mxu0 %v1591
  %1593 = vmatprep.subr.mxu0 0.0
  %v1594 = vand.u32 %v1090, 4294901760
  %1595 = vmatpush1.xpose.msra.mxu0 %v1594
  %1596 = vmatprep.subr.mxu0 0.0
  %v1597 = vand.u32 %v1087, 4294901760
  %1598 = vmatpush1.xpose.msra.mxu0 %v1597
  %1599 = vmatprep.subr.mxu0 0.0
  %v1600 = vand.u32 %v1084, 4294901760
  %1601 = vmatpush1.xpose.msra.mxu0 %v1600
  %1602 = vmatprep.subr.mxu0 0.0
  %1603 = vmatpush2.xpose.msra.mxu0 0.0
  %1604 = vmatprep.subr.mxu0 0.0
  %1605 = vmatpush2.xpose.msra.mxu0 0.0
  %1606 = vmatprep.subr.mxu0 0.0
  %1607 = vmatpush2.xpose.msra.mxu0 0.0
  %1608 = vmatprep.subr.mxu0 0.0
  %1609 = vmatpush2.xpose.msra.mxu0 0.0
  %1610 = vmatprep.subr.mxu0 0.0
  %1611 = vmatpush2.xpose.msra.mxu0 0.0
  %1612 = vmatprep.subr.mxu0 0.0
  %1613 = vmatpush2.xpose.msra.mxu0 0.0
  %1614 = vmatprep.subr.mxu0 0.0
  %1615 = vmatpush2.xpose.msra.mxu0 0.0
  %1616 = vmatprep.subr.mxu0 0.0
  %1617 = vmatpush2.xpose.msra.mxu0 0.0
  %1618 = vmatprep.subr.mxu0 0.0
  %1619 = vmatpush2.xpose.msra.mxu0 0.0
  %1620 = vmatprep.subr.mxu0 0.0
  %1621 = vmatpush2.xpose.msra.mxu0 0.0
  %1622 = vmatprep.subr.mxu0 0.0
  %1623 = vmatpush2.xpose.msra.mxu0 0.0
  %1624 = vmatprep.subr.mxu0 0.0
  %1625 = vmatpush2.xpose.msra.mxu0 0.0
  %1626 = vmatprep.subr.mxu0 0.0
  %1627 = vmatpush2.xpose.msra.mxu0 0.0
  %1628 = vmatprep.subr.mxu0 0.0
  %1629 = vmatpush2.xpose.msra.mxu0 0.0
  %1630 = vmatprep.subr.mxu0 0.0
  %v1631 = vand.u32 %v1135, 4294901760
  %1632 = vmatpush2.xpose.msra.mxu0 %v1631
  %1633 = vmatprep.subr.mxu0 0.0
  %v1634 = vand.u32 %v1132, 4294901760
  %1635 = vmatpush2.xpose.msra.mxu0 %v1634
  %1636 = vmatprep.mubr.f32.mxu0 0.0
  %v1637 = vand.u32 %v1075, 4294901760
  %v1638 = vsub.f32 %v1075, %v1637
  %v1639 = vand.u32 %v1638, 4294901760
  %1640 = vmatmul.mubr.f32.gmra.mxu0 %v1639
  %v1641 = vpop.f32.mrf.mxu0
  %v1642 = vadd.f32 %v1534, %v1641
  %v1643 = vpop.f32.mrf.mxu0
  %v1644 = vadd.f32 %v1536, %v1643
  %1645 = vmatprep.mubr.f32.mxu0 0.0
  %v1646 = vand.u32 %v1078, 4294901760
  %v1647 = vsub.f32 %v1078, %v1646
  %v1648 = vand.u32 %v1647, 4294901760
  %1649 = vmatmul.mubr.f32.gmra.mxu0 %v1648
  %v1650 = vpop.f32.mrf.mxu0
  %v1651 = vadd.f32 %v1542, %v1650
  %v1652 = vpop.f32.mrf.mxu0
  %v1653 = vadd.f32 %v1544, %v1652
  %1654 = vmatprep.mubr.f32.mxu0 0.0
  %v1655 = vand.u32 %v1081, 4294901760
  %v1656 = vsub.f32 %v1081, %v1655
  %v1657 = vand.u32 %v1656, 4294901760
  %1658 = vmatmul.mubr.f32.gmra.mxu0 %v1657
  %v1659 = vpop.f32.mrf.mxu0
  %v1660 = vadd.f32 %v1550, %v1659
  %v1661 = vpop.f32.mrf.mxu0
  %v1662 = vadd.f32 %v1552, %v1661
  %1663 = vdwg.mxu0
  %1664 = vmatprep.subr.mxu0 0.0
  %v1665 = vand.u32 %v1129, 4294901760
  %v1666 = vsub.f32 %v1129, %v1665
  %v1667 = vand.u32 %v1666, 4294901760
  %1668 = vmatpush1.xpose.msra.mxu0 %v1667
  %1669 = vmatprep.subr.mxu0 0.0
  %v1670 = vand.u32 %v1126, 4294901760
  %v1671 = vsub.f32 %v1126, %v1670
  %v1672 = vand.u32 %v1671, 4294901760
  %1673 = vmatpush1.xpose.msra.mxu0 %v1672
  %1674 = vmatprep.subr.mxu0 0.0
  %v1675 = vand.u32 %v1123, 4294901760
  %v1676 = vsub.f32 %v1123, %v1675
  %v1677 = vand.u32 %v1676, 4294901760
  %1678 = vmatpush1.xpose.msra.mxu0 %v1677
  %1679 = vmatprep.subr.mxu0 0.0
  %v1680 = vand.u32 %v1120, 4294901760
  %v1681 = vsub.f32 %v1120, %v1680
  %v1682 = vand.u32 %v1681, 4294901760
  %1683 = vmatpush1.xpose.msra.mxu0 %v1682
  %1684 = vmatprep.subr.mxu0 0.0
  %v1685 = vand.u32 %v1117, 4294901760
  %v1686 = vsub.f32 %v1117, %v1685
  %v1687 = vand.u32 %v1686, 4294901760
  %1688 = vmatpush1.xpose.msra.mxu0 %v1687
  %1689 = vmatprep.subr.mxu0 0.0
  %v1690 = vand.u32 %v1114, 4294901760
  %v1691 = vsub.f32 %v1114, %v1690
  %v1692 = vand.u32 %v1691, 4294901760
  %1693 = vmatpush1.xpose.msra.mxu0 %v1692
  %1694 = vmatprep.subr.mxu0 0.0
  %v1695 = vand.u32 %v1111, 4294901760
  %v1696 = vsub.f32 %v1111, %v1695
  %v1697 = vand.u32 %v1696, 4294901760
  %1698 = vmatpush1.xpose.msra.mxu0 %v1697
  %1699 = vmatprep.subr.mxu0 0.0
  %v1700 = vand.u32 %v1108, 4294901760
  %v1701 = vsub.f32 %v1108, %v1700
  %v1702 = vand.u32 %v1701, 4294901760
  %1703 = vmatpush1.xpose.msra.mxu0 %v1702
  %1704 = vmatprep.subr.mxu0 0.0
  %v1705 = vand.u32 %v1105, 4294901760
  %v1706 = vsub.f32 %v1105, %v1705
  %v1707 = vand.u32 %v1706, 4294901760
  %1708 = vmatpush1.xpose.msra.mxu0 %v1707
  %1709 = vmatprep.subr.mxu0 0.0
  %v1710 = vand.u32 %v1102, 4294901760
  %v1711 = vsub.f32 %v1102, %v1710
  %v1712 = vand.u32 %v1711, 4294901760
  %1713 = vmatpush1.xpose.msra.mxu0 %v1712
  %1714 = vmatprep.subr.mxu0 0.0
  %v1715 = vand.u32 %v1099, 4294901760
  %v1716 = vsub.f32 %v1099, %v1715
  %v1717 = vand.u32 %v1716, 4294901760
  %1718 = vmatpush1.xpose.msra.mxu0 %v1717
  %1719 = vmatprep.subr.mxu0 0.0
  %v1720 = vand.u32 %v1096, 4294901760
  %v1721 = vsub.f32 %v1096, %v1720
  %v1722 = vand.u32 %v1721, 4294901760
  %1723 = vmatpush1.xpose.msra.mxu0 %v1722
  %1724 = vmatprep.subr.mxu0 0.0
  %v1725 = vand.u32 %v1093, 4294901760
  %v1726 = vsub.f32 %v1093, %v1725
  %v1727 = vand.u32 %v1726, 4294901760
  %1728 = vmatpush1.xpose.msra.mxu0 %v1727
  %1729 = vmatprep.subr.mxu0 0.0
  %v1730 = vand.u32 %v1090, 4294901760
  %v1731 = vsub.f32 %v1090, %v1730
  %v1732 = vand.u32 %v1731, 4294901760
  %1733 = vmatpush1.xpose.msra.mxu0 %v1732
  %1734 = vmatprep.subr.mxu0 0.0
  %v1735 = vand.u32 %v1087, 4294901760
  %v1736 = vsub.f32 %v1087, %v1735
  %v1737 = vand.u32 %v1736, 4294901760
  %1738 = vmatpush1.xpose.msra.mxu0 %v1737
  %1739 = vmatprep.subr.mxu0 0.0
  %v1740 = vand.u32 %v1084, 4294901760
  %v1741 = vsub.f32 %v1084, %v1740
  %v1742 = vand.u32 %v1741, 4294901760
  %1743 = vmatpush1.xpose.msra.mxu0 %v1742
  %1744 = vmatprep.subr.mxu0 0.0
  %1745 = vmatpush2.xpose.msra.mxu0 0.0
  %1746 = vmatprep.subr.mxu0 0.0
  %1747 = vmatpush2.xpose.msra.mxu0 0.0
  %1748 = vmatprep.subr.mxu0 0.0
  %1749 = vmatpush2.xpose.msra.mxu0 0.0
  %1750 = vmatprep.subr.mxu0 0.0
  %1751 = vmatpush2.xpose.msra.mxu0 0.0
  %1752 = vmatprep.subr.mxu0 0.0
  %1753 = vmatpush2.xpose.msra.mxu0 0.0
  %1754 = vmatprep.subr.mxu0 0.0
  %1755 = vmatpush2.xpose.msra.mxu0 0.0
  %1756 = vmatprep.subr.mxu0 0.0
  %1757 = vmatpush2.xpose.msra.mxu0 0.0
  %1758 = vmatprep.subr.mxu0 0.0
  %1759 = vmatpush2.xpose.msra.mxu0 0.0
  %1760 = vmatprep.subr.mxu0 0.0
  %1761 = vmatpush2.xpose.msra.mxu0 0.0
  %1762 = vmatprep.subr.mxu0 0.0
  %1763 = vmatpush2.xpose.msra.mxu0 0.0
  %1764 = vmatprep.subr.mxu0 0.0
  %1765 = vmatpush2.xpose.msra.mxu0 0.0
  %1766 = vmatprep.subr.mxu0 0.0
  %1767 = vmatpush2.xpose.msra.mxu0 0.0
  %1768 = vmatprep.subr.mxu0 0.0
  %1769 = vmatpush2.xpose.msra.mxu0 0.0
  %1770 = vmatprep.subr.mxu0 0.0
  %1771 = vmatpush2.xpose.msra.mxu0 0.0
  %1772 = vmatprep.subr.mxu0 0.0
  %v1773 = vand.u32 %v1135, 4294901760
  %v1774 = vsub.f32 %v1135, %v1773
  %v1775 = vand.u32 %v1774, 4294901760
  %1776 = vmatpush2.xpose.msra.mxu0 %v1775
  %1777 = vmatprep.subr.mxu0 0.0
  %v1778 = vand.u32 %v1132, 4294901760
  %v1779 = vsub.f32 %v1132, %v1778
  %v1780 = vand.u32 %v1779, 4294901760
  %1781 = vmatpush2.xpose.msra.mxu0 %v1780
  %1782 = vmatprep.mubr.f32.mxu0 0.0
  %v1783 = vand.u32 %v1075, 4294901760
  %1784 = vmatmul.mubr.f32.gmra.mxu0 %v1783
  %v1785 = vpop.f32.mrf.mxu0
  %v1786 = vadd.f32 %v1642, %v1785
  %v1787 = vpop.f32.mrf.mxu0
  %v1788 = vadd.f32 %v1644, %v1787
  %1789 = vmatprep.mubr.f32.mxu0 0.0
  %v1790 = vand.u32 %v1078, 4294901760
  %1791 = vmatmul.mubr.f32.gmra.mxu0 %v1790
  %v1792 = vpop.f32.mrf.mxu0
  %v1793 = vadd.f32 %v1651, %v1792
  %v1794 = vpop.f32.mrf.mxu0
  %v1795 = vadd.f32 %v1653, %v1794
  %1796 = vmatprep.mubr.f32.mxu0 0.0
  %v1797 = vand.u32 %v1081, 4294901760
  %1798 = vmatmul.mubr.f32.gmra.mxu0 %v1797
  %v1799 = vpop.f32.mrf.mxu0
  %v1800 = vadd.f32 %v1660, %v1799
  %v1801 = vpop.f32.mrf.mxu0
  %v1802 = vadd.f32 %v1662, %v1801
  %1803 = vdwg.mxu0
  %1804 = vmatprep.subr.mxu0 0.0
  %v1805 = vand.u32 %v1129, 4294901760
  %1806 = vmatpush1.xpose.msra.mxu0 %v1805
  %1807 = vmatprep.subr.mxu0 0.0
  %v1808 = vand.u32 %v1126, 4294901760
  %1809 = vmatpush1.xpose.msra.mxu0 %v1808
  %1810 = vmatprep.subr.mxu0 0.0
  %v1811 = vand.u32 %v1123, 4294901760
  %1812 = vmatpush1.xpose.msra.mxu0 %v1811
  %1813 = vmatprep.subr.mxu0 0.0
  %v1814 = vand.u32 %v1120, 4294901760
  %1815 = vmatpush1.xpose.msra.mxu0 %v1814
  %1816 = vmatprep.subr.mxu0 0.0
  %v1817 = vand.u32 %v1117, 4294901760
  %1818 = vmatpush1.xpose.msra.mxu0 %v1817
  %1819 = vmatprep.subr.mxu0 0.0
  %v1820 = vand.u32 %v1114, 4294901760
  %1821 = vmatpush1.xpose.msra.mxu0 %v1820
  %1822 = vmatprep.subr.mxu0 0.0
  %v1823 = vand.u32 %v1111, 4294901760
  %1824 = vmatpush1.xpose.msra.mxu0 %v1823
  %1825 = vmatprep.subr.mxu0 0.0
  %v1826 = vand.u32 %v1108, 4294901760
  %1827 = vmatpush1.xpose.msra.mxu0 %v1826
  %1828 = vmatprep.subr.mxu0 0.0
  %v1829 = vand.u32 %v1105, 4294901760
  %1830 = vmatpush1.xpose.msra.mxu0 %v1829
  %1831 = vmatprep.subr.mxu0 0.0
  %v1832 = vand.u32 %v1102, 4294901760
  %1833 = vmatpush1.xpose.msra.mxu0 %v1832
  %1834 = vmatprep.subr.mxu0 0.0
  %v1835 = vand.u32 %v1099, 4294901760
  %1836 = vmatpush1.xpose.msra.mxu0 %v1835
  %1837 = vmatprep.subr.mxu0 0.0
  %v1838 = vand.u32 %v1096, 4294901760
  %1839 = vmatpush1.xpose.msra.mxu0 %v1838
  %1840 = vmatprep.subr.mxu0 0.0
  %v1841 = vand.u32 %v1093, 4294901760
  %1842 = vmatpush1.xpose.msra.mxu0 %v1841
  %1843 = vmatprep.subr.mxu0 0.0
  %v1844 = vand.u32 %v1090, 4294901760
  %1845 = vmatpush1.xpose.msra.mxu0 %v1844
  %1846 = vmatprep.subr.mxu0 0.0
  %v1847 = vand.u32 %v1087, 4294901760
  %1848 = vmatpush1.xpose.msra.mxu0 %v1847
  %1849 = vmatprep.subr.mxu0 0.0
  %v1850 = vand.u32 %v1084, 4294901760
  %1851 = vmatpush1.xpose.msra.mxu0 %v1850
  %1852 = vmatprep.subr.mxu0 0.0
  %1853 = vmatpush2.xpose.msra.mxu0 0.0
  %1854 = vmatprep.subr.mxu0 0.0
  %1855 = vmatpush2.xpose.msra.mxu0 0.0
  %1856 = vmatprep.subr.mxu0 0.0
  %1857 = vmatpush2.xpose.msra.mxu0 0.0
  %1858 = vmatprep.subr.mxu0 0.0
  %1859 = vmatpush2.xpose.msra.mxu0 0.0
  %1860 = vmatprep.subr.mxu0 0.0
  %1861 = vmatpush2.xpose.msra.mxu0 0.0
  %1862 = vmatprep.subr.mxu0 0.0
  %1863 = vmatpush2.xpose.msra.mxu0 0.0
  %1864 = vmatprep.subr.mxu0 0.0
  %1865 = vmatpush2.xpose.msra.mxu0 0.0
  %1866 = vmatprep.subr.mxu0 0.0
  %1867 = vmatpush2.xpose.msra.mxu0 0.0
  %1868 = vmatprep.subr.mxu0 0.0
  %1869 = vmatpush2.xpose.msra.mxu0 0.0
  %1870 = vmatprep.subr.mxu0 0.0
  %1871 = vmatpush2.xpose.msra.mxu0 0.0
  %1872 = vmatprep.subr.mxu0 0.0
  %1873 = vmatpush2.xpose.msra.mxu0 0.0
  %1874 = vmatprep.subr.mxu0 0.0
  %1875 = vmatpush2.xpose.msra.mxu0 0.0
  %1876 = vmatprep.subr.mxu0 0.0
  %1877 = vmatpush2.xpose.msra.mxu0 0.0
  %1878 = vmatprep.subr.mxu0 0.0
  %1879 = vmatpush2.xpose.msra.mxu0 0.0
  %1880 = vmatprep.subr.mxu0 0.0
  %v1881 = vand.u32 %v1135, 4294901760
  %1882 = vmatpush2.xpose.msra.mxu0 %v1881
  %1883 = vmatprep.subr.mxu0 0.0
  %v1884 = vand.u32 %v1132, 4294901760
  %1885 = vmatpush2.xpose.msra.mxu0 %v1884
  %1886 = vmatprep.mubr.f32.mxu0 0.0
  %v1887 = vand.u32 %v1075, 4294901760
  %1888 = vmatmul.mubr.f32.gmra.mxu0 %v1887
  %v1889 = vpop.f32.mrf.mxu0
  %v1890 = vadd.f32 %v1786, %v1889
  %v1891 = vpop.f32.mrf.mxu0
  %v1892 = vadd.f32 %v1788, %v1891
  %1893 = vmatprep.mubr.f32.mxu0 0.0
  %v1894 = vand.u32 %v1078, 4294901760
  %1895 = vmatmul.mubr.f32.gmra.mxu0 %v1894
  %v1896 = vpop.f32.mrf.mxu0
  %v1897 = vadd.f32 %v1793, %v1896
  %v1898 = vpop.f32.mrf.mxu0
  %v1899 = vadd.f32 %v1795, %v1898
  %1900 = vmatprep.mubr.f32.mxu0 0.0
  %v1901 = vand.u32 %v1081, 4294901760
  %1902 = vmatmul.mubr.f32.gmra.mxu0 %v1901
  %v1903 = vpop.f32.mrf.mxu0
  %v1904 = vadd.f32 %v1800, %v1903
  %v1905 = vpop.f32.mrf.mxu0
  %v1906 = vadd.f32 %v1802, %v1905
  %1907 = vdwg.mxu0
  %1908 = vst [vmem:[%s1] sm:$0xff] %v1056
  %vm1909 = vcmask 130048
  %1910 = vst.msk [vmem:[%s1 + $0x8] sm:$0xff] %vm1909, %v1058
  %1911 = vst [vmem:[%s1 + $0x10] sm:$0xff] %v1063
  %1912 = vst.msk [vmem:[%s1 + $0x18] sm:$0xff] %vm1909, %v1065
  %1913 = vst [vmem:[%s1 + $0x20] sm:$0x7] %v1070
  %vm1914 = vcmask 124928
  %1915 = vst.msk [vmem:[%s1 + $0x28] sm:$0x7] %vm1914, %v1072
  %1916 = vst [vmem:[%s1 + $0x30] sm:$0xff] %v1890
  %1917 = vst.msk [vmem:[%s1 + $0x38] sm:$0xff] %vm1909, %v1892
  %1918 = vst [vmem:[%s1 + $0x40] sm:$0xff] %v1897
  %1919 = vst.msk [vmem:[%s1 + $0x48] sm:$0xff] %vm1909, %v1899
  %1920 = vst [vmem:[%s1 + $0x50] sm:$0x7] %v1904
  %1921 = vst.msk [vmem:[%s1 + $0x58] sm:$0x7] %vm1914, %v1906
  // Predicated region
  $region20: #{tpu_custom_call.1} parent=0 // pred_check
    _
  $region21: #{tpu_custom_call.1} parent=0 // pred_check_branch
    %1923 = sbr.rel (0) target = $region23
  $region22: #{tpu_custom_call.1} parent=0 // pred_region
    _
  $region23: #{tpu_custom_call.1} parent=0 // pred_fallthru
    _
  // Predicated region
  $region24: #{tpu_custom_call.1} parent=0 // pred_check
    _
  $region25: #{tpu_custom_call.1} parent=0 // pred_check_branch
    %1925 = sbr.rel (0) target = $region27
  $region26: #{tpu_custom_call.1} parent=0 // pred_region
    _
  $region27: #{tpu_custom_call.1} parent=0 // pred_fallthru
    _

</llo_original>
